<compile_context>
chip_gen: v7x
topology: tpu7x:2x2x1
jax: 0.10.0
libtpu: 0.0.40
codegen_flags: <defaults>
</compile_context>

<pallas_src>
import functools
import math

import jax
import jax.numpy as jnp
from jax.experimental import pallas as pl
from jax.experimental.pallas import tpu as pltpu


def _mha_kernel(x_ref, wqkv_ref, bqkv_ref, wo_ref, bo_ref, out_ref, *,
                num_heads, head_dim, block_b, seq_len, embed_dim):
    """One grid step == `block_b` batch elements.

    x_ref:    (block_b, T, E)   input block
    wqkv_ref: (E, 3E)           fused Q/K/V projection weight (in, out)
    bqkv_ref: (1, 3E)           fused Q/K/V projection bias
    wo_ref:   (E, E)            output projection weight (in, out)
    bo_ref:   (1, E)            output projection bias
    out_ref:  (block_b, T, E)   output block
    """
    Bb, T, E, Dh = block_b, seq_len, embed_dim, head_dim
    R = Bb * T

    # --- fused Q/K/V projection on (Bb*T, E): one MXU matmul ---
    x = x_ref[...].reshape(R, E)                                   # merge leading dims
    qkv = jnp.dot(x, wqkv_ref[...],
                  preferred_element_type=jnp.float32) + bqkv_ref[...]   # (R, 3E)

    scale = 1.0 / math.sqrt(Dh)
    q = (qkv[:, 0:E] * scale).reshape(Bb, T, E)    # fold scale into q once
    k = qkv[:, E:2 * E].reshape(Bb, T, E)
    v = qkv[:, 2 * E:3 * E].reshape(Bb, T, E)

    wo = wo_ref[...]                               # (E, E), loaded once

    # --- per-head attention; output projection accumulated per head ---
    # (static unrolled loop over the few heads; each iteration is pure 3-D
    #  einsums with a leading batch dim — no transposes, no concatenate)
    acc = None
    for h in range(num_heads):
        lo = h * Dh
        qh = q[:, :, lo:lo + Dh]                   # (Bb, T, Dh)
        kh = k[:, :, lo:lo + Dh]
        vh = v[:, :, lo:lo + Dh]

        # scores = q . k contracted on Dh (no explicit kh.T)
        s = jnp.einsum('bqd,bkd->bqk', qh, kh,
                       preferred_element_type=jnp.float32)         # (Bb, T, T)

        # numerically-stable softmax in f32; EUP approx reciprocal
        m = jnp.max(s, axis=-1, keepdims=True)
        e = jnp.exp(s - m)
        p = e * pl.reciprocal(jnp.sum(e, axis=-1, keepdims=True), approx=True)

        ctx_h = jnp.einsum('bqk,bkd->bqd', p, vh,
                           preferred_element_type=jnp.float32)      # (Bb, T, Dh)

        # out += ctx_h @ W_o[h*Dh:(h+1)*Dh, :]   (== concat(ctx_h) @ W_o)
        contrib = jnp.dot(ctx_h.reshape(R, Dh), wo[lo:lo + Dh, :],
                          preferred_element_type=jnp.float32)       # (R, E)
        acc = contrib if acc is None else acc + contrib

    out = acc + bo_ref[...]                                         # (R, E)
    out_ref[...] = out.reshape(Bb, T, E).astype(out_ref.dtype)


def multi_head_attention(x, params, *, num_heads, target_rows=256):
    """x: (B, T, E) float32. params: dict of weights/biases. Returns (B, T, E)."""
    B, T, E = x.shape
    head_dim = E // num_heads

    # Fuse Q/K/V weights -> (E, 3E) and biases -> (1, 3E) in the wrapper.
    wqkv = jnp.concatenate([params["wq"], params["wk"], params["wv"]], axis=1)
    bqkv = jnp.concatenate(
        [params["bq"], params["bk"], params["bv"]]).reshape(1, 3 * E)
    wo = params["wo"]
    bo = params["bo"].reshape(1, E)

    # Batch elements per grid step: fill the matmul M dimension (~target_rows
    # rows) while keeping a parallel batch grid axis for megacore sharding.
    max_bb = max(1, target_rows // T)
    block_b = 1
    for d in range(1, B + 1):
        if B % d == 0 and d <= max_bb:
            block_b = d

    kernel = functools.partial(
        _mha_kernel, num_heads=num_heads, head_dim=head_dim,
        block_b=block_b, seq_len=T, embed_dim=E)

    return pl.pallas_call(
        kernel,
        out_shape=jax.ShapeDtypeStruct((B, T, E), x.dtype),
        grid_spec=pltpu.PrefetchScalarGridSpec(
            num_scalar_prefetch=0,
            grid=(B // block_b,),
            in_specs=[
                pl.BlockSpec((block_b, T, E), lambda i: (i, 0, 0)),  # x
                pl.BlockSpec((E, 3 * E), lambda i: (0, 0)),          # fused QKV W
                pl.BlockSpec((1, 3 * E), lambda i: (0, 0)),          # fused QKV b
                pl.BlockSpec((E, E), lambda i: (0, 0)),              # out-proj W
                pl.BlockSpec((1, E), lambda i: (0, 0)),              # out-proj b
            ],
            out_specs=pl.BlockSpec((block_b, T, E), lambda i: (i, 0, 0)),
        ),
        compiler_params=pltpu.CompilerParams(
            dimension_semantics=("parallel",)),
    )(x, wqkv, bqkv, wo, bo)


def _reference(x, params, *, num_heads):
    """Plain-JAX reference mirroring the PyTorch forward (eval mode, mask=None)."""
    B, T, E = x.shape
    Dh = E // num_heads
    q = x @ params["wq"] + params["bq"]
    k = x @ params["wk"] + params["bk"]
    v = x @ params["wv"] + params["bv"]
    q = q.reshape(B, T, num_heads, Dh).transpose(0, 2, 1, 3)
    k = k.reshape(B, T, num_heads, Dh).transpose(0, 2, 1, 3)
    v = v.reshape(B, T, num_heads, Dh).transpose(0, 2, 1, 3)
    scores = jnp.einsum("bhqd,bhkd->bhqk", q, k) / math.sqrt(Dh)
    p = jax.nn.softmax(scores, axis=-1)
    out = jnp.einsum("bhqk,bhkd->bhqd", p, v)
    out = out.transpose(0, 2, 1, 3).reshape(B, T, E)
    return out @ params["wo"] + params["bo"]


if __name__ == "__main__":
    B, T, E, H = 2, 8, 32, 4

    key = jax.random.PRNGKey(0)
    keys = jax.random.split(key, 9)
    scale = 1.0 / math.sqrt(E)   # ~ PyTorch Linear default init scale
    params = {
        "wq": jax.random.uniform(keys[0], (E, E), jnp.float32, -scale, scale),
        "bq": jax.random.uniform(keys[1], (E,), jnp.float32, -scale, scale),
        "wk": jax.random.uniform(keys[2], (E, E), jnp.float32, -scale, scale),
        "bk": jax.random.uniform(keys[3], (E,), jnp.float32, -scale, scale),
        "wv": jax.random.uniform(keys[4], (E, E), jnp.float32, -scale, scale),
        "bv": jax.random.uniform(keys[5], (E,), jnp.float32, -scale, scale),
        "wo": jax.random.uniform(keys[6], (E, E), jnp.float32, -scale, scale),
        "bo": jax.random.uniform(keys[7], (E,), jnp.float32, -scale, scale),
    }
    x = jax.random.normal(keys[8], (B, T, E), jnp.float32)

    out = multi_head_attention(x, params, num_heads=H)
    out = jax.block_until_ready(out)

    ref = _reference(x, params, num_heads=H)
    assert out.shape == (B, T, E)
    # Tolerance loosened slightly vs pure-f32 because the softmax denominator
    # uses the EUP approximate reciprocal (pl.reciprocal(approx=True)).
    assert jnp.allclose(out, ref, atol=1e-3, rtol=1e-3), \
        f"max abs err {jnp.max(jnp.abs(out - ref))}"

    print("KERNEL_OK")
</pallas_src>

<mosaic_0001>
module attributes {stable_mosaic.version = 11 : i64} {
  func.func @_mha_kernel(%arg0: i32, %arg1: memref<2x8x32xf32, #tpu.memory_space<vmem>>, %arg2: memref<32x96xf32, #tpu.memory_space<vmem>>, %arg3: memref<1x96xf32, #tpu.memory_space<vmem>>, %arg4: memref<32x32xf32, #tpu.memory_space<vmem>>, %arg5: memref<1x32xf32, #tpu.memory_space<vmem>>, %arg6: memref<2x8x32xf32, #tpu.memory_space<vmem>>) attributes {dimension_semantics = [#tpu.dimension_semantics<parallel>], iteration_bounds = array<i64: 1>, scalar_prefetch = 0 : i64, scratch_operands = 0 : i64, tpu.core_type = #tpu.core_type<tc>, window_params = [{transform_indices = @transform_0, window_bounds = array<i64: 2, 8, 32>}, {pipeline_mode = #tpu.pipeline_mode<synchronous>, transform_indices = @transform_1, window_bounds = array<i64: 32, 96>}, {pipeline_mode = #tpu.pipeline_mode<synchronous>, transform_indices = @transform_2, window_bounds = array<i64: 1, 96>}, {pipeline_mode = #tpu.pipeline_mode<synchronous>, transform_indices = @transform_3, window_bounds = array<i64: 32, 32>}, {pipeline_mode = #tpu.pipeline_mode<synchronous>, transform_indices = @transform_4, window_bounds = array<i64: 1, 32>}, {transform_indices = @transform_5, window_bounds = array<i64: 2, 8, 32>}]} {
    %c0 = arith.constant 0 : index
    %c0_0 = arith.constant 0 : index
    %c0_1 = arith.constant 0 : index
    %0 = vector.load %arg1[%c0, %c0_0, %c0_1] : memref<2x8x32xf32, #tpu.memory_space<vmem>>, vector<2x8x32xf32>
    %1 = vector.shape_cast %0 : vector<2x8x32xf32> to vector<16x32xf32>
    %c0_2 = arith.constant 0 : index
    %c0_3 = arith.constant 0 : index
    %2 = vector.load %arg2[%c0_2, %c0_3] : memref<32x96xf32, #tpu.memory_space<vmem>>, vector<32x96xf32>
    %cst = arith.constant dense<0.000000e+00> : vector<16x96xf32>
    %3 = tpu.matmul %1, %2, %cst {dimension_numbers = #tpu.dot_dimension_numbers<[1], [0], [0], [1], [0, 0, 1, 1], [], []>} : vector<16x32xf32>, vector<32x96xf32>, vector<16x96xf32> -> vector<16x96xf32>
    %c0_4 = arith.constant 0 : index
    %c0_5 = arith.constant 0 : index
    %4 = vector.load %arg3[%c0_4, %c0_5] : memref<1x96xf32, #tpu.memory_space<vmem>>, vector<1x96xf32>
    %5 = vector.broadcast %4 : vector<1x96xf32> to vector<16x96xf32>
    %6 = arith.addf %3, %5 : vector<16x96xf32>
    %7 = vector.extract_strided_slice %6 {offsets = [0, 0], sizes = [16, 32], strides = [1, 1]} : vector<16x96xf32> to vector<16x32xf32>
    %cst_6 = arith.constant 0.353553385 : f32
    %8 = vector.broadcast %cst_6 : f32 to vector<16x32xf32>
    %9 = arith.mulf %7, %8 : vector<16x32xf32>
    %10 = vector.shape_cast %9 : vector<16x32xf32> to vector<2x8x32xf32>
    %11 = vector.extract_strided_slice %6 {offsets = [0, 32], sizes = [16, 32], strides = [1, 1]} : vector<16x96xf32> to vector<16x32xf32>
    %12 = vector.shape_cast %11 : vector<16x32xf32> to vector<2x8x32xf32>
    %13 = vector.extract_strided_slice %6 {offsets = [0, 64], sizes = [16, 32], strides = [1, 1]} : vector<16x96xf32> to vector<16x32xf32>
    %14 = vector.shape_cast %13 : vector<16x32xf32> to vector<2x8x32xf32>
    %c0_7 = arith.constant 0 : index
    %c0_8 = arith.constant 0 : index
    %15 = vector.load %arg4[%c0_7, %c0_8] : memref<32x32xf32, #tpu.memory_space<vmem>>, vector<32x32xf32>
    %16 = vector.extract_strided_slice %10 {offsets = [0, 0, 0], sizes = [2, 8, 8], strides = [1, 1, 1]} : vector<2x8x32xf32> to vector<2x8x8xf32>
    %17 = vector.extract_strided_slice %12 {offsets = [0, 0, 0], sizes = [2, 8, 8], strides = [1, 1, 1]} : vector<2x8x32xf32> to vector<2x8x8xf32>
    %18 = vector.extract_strided_slice %14 {offsets = [0, 0, 0], sizes = [2, 8, 8], strides = [1, 1, 1]} : vector<2x8x32xf32> to vector<2x8x8xf32>
    "tpu.trace_start"() <{level = 10 : i32, message = "bqd,bkd->bqk"}> : () -> ()
    %cst_9 = arith.constant dense<0.000000e+00> : vector<2x8x8xf32>
    %19 = tpu.matmul %16, %17, %cst_9 {dimension_numbers = #tpu.dot_dimension_numbers<[2], [2], [1], [1], [0, 0, 0, 1, 1, 1], [0], [0]>} : vector<2x8x8xf32>, vector<2x8x8xf32>, vector<2x8x8xf32> -> vector<2x8x8xf32>
    "tpu.trace_stop"() : () -> ()
    %cst_10 = arith.constant dense<0xFF800000> : vector<2x8xf32>
    %20 = vector.multi_reduction <maximumf>, %19, %cst_10 [2] : vector<2x8x8xf32> to vector<2x8xf32>
    %21 = vector.shape_cast %20 : vector<2x8xf32> to vector<2x8x1xf32>
    %22 = vector.broadcast %21 : vector<2x8x1xf32> to vector<2x8x8xf32>
    %23 = arith.subf %19, %22 : vector<2x8x8xf32>
    %24 = math.exp %23 : vector<2x8x8xf32>
    %cst_11 = arith.constant dense<0.000000e+00> : vector<2x8xf32>
    %25 = vector.multi_reduction <add>, %24, %cst_11 [2] : vector<2x8x8xf32> to vector<2x8xf32>
    %26 = vector.shape_cast %25 : vector<2x8xf32> to vector<2x8x1xf32>
    %27 = tpu.reciprocal %26 {approx = true} : vector<2x8x1xf32> -> vector<2x8x1xf32>
    %28 = vector.broadcast %27 : vector<2x8x1xf32> to vector<2x8x8xf32>
    %29 = arith.mulf %24, %28 : vector<2x8x8xf32>
    "tpu.trace_start"() <{level = 10 : i32, message = "bqk,bkd->bqd"}> : () -> ()
    %cst_12 = arith.constant dense<0.000000e+00> : vector<2x8x8xf32>
    %30 = tpu.matmul %29, %18, %cst_12 {dimension_numbers = #tpu.dot_dimension_numbers<[2], [1], [1], [2], [0, 0, 0, 1, 1, 2], [0], [0]>} : vector<2x8x8xf32>, vector<2x8x8xf32>, vector<2x8x8xf32> -> vector<2x8x8xf32>
    "tpu.trace_stop"() : () -> ()
    %31 = vector.shape_cast %30 : vector<2x8x8xf32> to vector<16x8xf32>
    %32 = vector.extract_strided_slice %15 {offsets = [0, 0], sizes = [8, 32], strides = [1, 1]} : vector<32x32xf32> to vector<8x32xf32>
    %cst_13 = arith.constant dense<0.000000e+00> : vector<16x32xf32>
    %33 = tpu.matmul %31, %32, %cst_13 {dimension_numbers = #tpu.dot_dimension_numbers<[1], [0], [0], [1], [0, 0, 1, 1], [], []>} : vector<16x8xf32>, vector<8x32xf32>, vector<16x32xf32> -> vector<16x32xf32>
    %34 = vector.extract_strided_slice %10 {offsets = [0, 0, 8], sizes = [2, 8, 8], strides = [1, 1, 1]} : vector<2x8x32xf32> to vector<2x8x8xf32>
    %35 = vector.extract_strided_slice %12 {offsets = [0, 0, 8], sizes = [2, 8, 8], strides = [1, 1, 1]} : vector<2x8x32xf32> to vector<2x8x8xf32>
    %36 = vector.extract_strided_slice %14 {offsets = [0, 0, 8], sizes = [2, 8, 8], strides = [1, 1, 1]} : vector<2x8x32xf32> to vector<2x8x8xf32>
    "tpu.trace_start"() <{level = 10 : i32, message = "bqd,bkd->bqk"}> : () -> ()
    %cst_14 = arith.constant dense<0.000000e+00> : vector<2x8x8xf32>
    %37 = tpu.matmul %34, %35, %cst_14 {dimension_numbers = #tpu.dot_dimension_numbers<[2], [2], [1], [1], [0, 0, 0, 1, 1, 1], [0], [0]>} : vector<2x8x8xf32>, vector<2x8x8xf32>, vector<2x8x8xf32> -> vector<2x8x8xf32>
    "tpu.trace_stop"() : () -> ()
    %cst_15 = arith.constant dense<0xFF800000> : vector<2x8xf32>
    %38 = vector.multi_reduction <maximumf>, %37, %cst_15 [2] : vector<2x8x8xf32> to vector<2x8xf32>
    %39 = vector.shape_cast %38 : vector<2x8xf32> to vector<2x8x1xf32>
    %40 = vector.broadcast %39 : vector<2x8x1xf32> to vector<2x8x8xf32>
    %41 = arith.subf %37, %40 : vector<2x8x8xf32>
    %42 = math.exp %41 : vector<2x8x8xf32>
    %cst_16 = arith.constant dense<0.000000e+00> : vector<2x8xf32>
    %43 = vector.multi_reduction <add>, %42, %cst_16 [2] : vector<2x8x8xf32> to vector<2x8xf32>
    %44 = vector.shape_cast %43 : vector<2x8xf32> to vector<2x8x1xf32>
    %45 = tpu.reciprocal %44 {approx = true} : vector<2x8x1xf32> -> vector<2x8x1xf32>
    %46 = vector.broadcast %45 : vector<2x8x1xf32> to vector<2x8x8xf32>
    %47 = arith.mulf %42, %46 : vector<2x8x8xf32>
    "tpu.trace_start"() <{level = 10 : i32, message = "bqk,bkd->bqd"}> : () -> ()
    %cst_17 = arith.constant dense<0.000000e+00> : vector<2x8x8xf32>
    %48 = tpu.matmul %47, %36, %cst_17 {dimension_numbers = #tpu.dot_dimension_numbers<[2], [1], [1], [2], [0, 0, 0, 1, 1, 2], [0], [0]>} : vector<2x8x8xf32>, vector<2x8x8xf32>, vector<2x8x8xf32> -> vector<2x8x8xf32>
    "tpu.trace_stop"() : () -> ()
    %49 = vector.shape_cast %48 : vector<2x8x8xf32> to vector<16x8xf32>
    %50 = vector.extract_strided_slice %15 {offsets = [8, 0], sizes = [8, 32], strides = [1, 1]} : vector<32x32xf32> to vector<8x32xf32>
    %cst_18 = arith.constant dense<0.000000e+00> : vector<16x32xf32>
    %51 = tpu.matmul %49, %50, %cst_18 {dimension_numbers = #tpu.dot_dimension_numbers<[1], [0], [0], [1], [0, 0, 1, 1], [], []>} : vector<16x8xf32>, vector<8x32xf32>, vector<16x32xf32> -> vector<16x32xf32>
    %52 = arith.addf %33, %51 : vector<16x32xf32>
    %53 = vector.extract_strided_slice %10 {offsets = [0, 0, 16], sizes = [2, 8, 8], strides = [1, 1, 1]} : vector<2x8x32xf32> to vector<2x8x8xf32>
    %54 = vector.extract_strided_slice %12 {offsets = [0, 0, 16], sizes = [2, 8, 8], strides = [1, 1, 1]} : vector<2x8x32xf32> to vector<2x8x8xf32>
    %55 = vector.extract_strided_slice %14 {offsets = [0, 0, 16], sizes = [2, 8, 8], strides = [1, 1, 1]} : vector<2x8x32xf32> to vector<2x8x8xf32>
    "tpu.trace_start"() <{level = 10 : i32, message = "bqd,bkd->bqk"}> : () -> ()
    %cst_19 = arith.constant dense<0.000000e+00> : vector<2x8x8xf32>
    %56 = tpu.matmul %53, %54, %cst_19 {dimension_numbers = #tpu.dot_dimension_numbers<[2], [2], [1], [1], [0, 0, 0, 1, 1, 1], [0], [0]>} : vector<2x8x8xf32>, vector<2x8x8xf32>, vector<2x8x8xf32> -> vector<2x8x8xf32>
    "tpu.trace_stop"() : () -> ()
    %cst_20 = arith.constant dense<0xFF800000> : vector<2x8xf32>
    %57 = vector.multi_reduction <maximumf>, %56, %cst_20 [2] : vector<2x8x8xf32> to vector<2x8xf32>
    %58 = vector.shape_cast %57 : vector<2x8xf32> to vector<2x8x1xf32>
    %59 = vector.broadcast %58 : vector<2x8x1xf32> to vector<2x8x8xf32>
    %60 = arith.subf %56, %59 : vector<2x8x8xf32>
    %61 = math.exp %60 : vector<2x8x8xf32>
    %cst_21 = arith.constant dense<0.000000e+00> : vector<2x8xf32>
    %62 = vector.multi_reduction <add>, %61, %cst_21 [2] : vector<2x8x8xf32> to vector<2x8xf32>
    %63 = vector.shape_cast %62 : vector<2x8xf32> to vector<2x8x1xf32>
    %64 = tpu.reciprocal %63 {approx = true} : vector<2x8x1xf32> -> vector<2x8x1xf32>
    %65 = vector.broadcast %64 : vector<2x8x1xf32> to vector<2x8x8xf32>
    %66 = arith.mulf %61, %65 : vector<2x8x8xf32>
    "tpu.trace_start"() <{level = 10 : i32, message = "bqk,bkd->bqd"}> : () -> ()
    %cst_22 = arith.constant dense<0.000000e+00> : vector<2x8x8xf32>
    %67 = tpu.matmul %66, %55, %cst_22 {dimension_numbers = #tpu.dot_dimension_numbers<[2], [1], [1], [2], [0, 0, 0, 1, 1, 2], [0], [0]>} : vector<2x8x8xf32>, vector<2x8x8xf32>, vector<2x8x8xf32> -> vector<2x8x8xf32>
    "tpu.trace_stop"() : () -> ()
    %68 = vector.shape_cast %67 : vector<2x8x8xf32> to vector<16x8xf32>
    %69 = vector.extract_strided_slice %15 {offsets = [16, 0], sizes = [8, 32], strides = [1, 1]} : vector<32x32xf32> to vector<8x32xf32>
    %cst_23 = arith.constant dense<0.000000e+00> : vector<16x32xf32>
    %70 = tpu.matmul %68, %69, %cst_23 {dimension_numbers = #tpu.dot_dimension_numbers<[1], [0], [0], [1], [0, 0, 1, 1], [], []>} : vector<16x8xf32>, vector<8x32xf32>, vector<16x32xf32> -> vector<16x32xf32>
    %71 = arith.addf %52, %70 : vector<16x32xf32>
    %72 = vector.extract_strided_slice %10 {offsets = [0, 0, 24], sizes = [2, 8, 8], strides = [1, 1, 1]} : vector<2x8x32xf32> to vector<2x8x8xf32>
    %73 = vector.extract_strided_slice %12 {offsets = [0, 0, 24], sizes = [2, 8, 8], strides = [1, 1, 1]} : vector<2x8x32xf32> to vector<2x8x8xf32>
    %74 = vector.extract_strided_slice %14 {offsets = [0, 0, 24], sizes = [2, 8, 8], strides = [1, 1, 1]} : vector<2x8x32xf32> to vector<2x8x8xf32>
    "tpu.trace_start"() <{level = 10 : i32, message = "bqd,bkd->bqk"}> : () -> ()
    %cst_24 = arith.constant dense<0.000000e+00> : vector<2x8x8xf32>
    %75 = tpu.matmul %72, %73, %cst_24 {dimension_numbers = #tpu.dot_dimension_numbers<[2], [2], [1], [1], [0, 0, 0, 1, 1, 1], [0], [0]>} : vector<2x8x8xf32>, vector<2x8x8xf32>, vector<2x8x8xf32> -> vector<2x8x8xf32>
    "tpu.trace_stop"() : () -> ()
    %cst_25 = arith.constant dense<0xFF800000> : vector<2x8xf32>
    %76 = vector.multi_reduction <maximumf>, %75, %cst_25 [2] : vector<2x8x8xf32> to vector<2x8xf32>
    %77 = vector.shape_cast %76 : vector<2x8xf32> to vector<2x8x1xf32>
    %78 = vector.broadcast %77 : vector<2x8x1xf32> to vector<2x8x8xf32>
    %79 = arith.subf %75, %78 : vector<2x8x8xf32>
    %80 = math.exp %79 : vector<2x8x8xf32>
    %cst_26 = arith.constant dense<0.000000e+00> : vector<2x8xf32>
    %81 = vector.multi_reduction <add>, %80, %cst_26 [2] : vector<2x8x8xf32> to vector<2x8xf32>
    %82 = vector.shape_cast %81 : vector<2x8xf32> to vector<2x8x1xf32>
    %83 = tpu.reciprocal %82 {approx = true} : vector<2x8x1xf32> -> vector<2x8x1xf32>
    %84 = vector.broadcast %83 : vector<2x8x1xf32> to vector<2x8x8xf32>
    %85 = arith.mulf %80, %84 : vector<2x8x8xf32>
    "tpu.trace_start"() <{level = 10 : i32, message = "bqk,bkd->bqd"}> : () -> ()
    %cst_27 = arith.constant dense<0.000000e+00> : vector<2x8x8xf32>
    %86 = tpu.matmul %85, %74, %cst_27 {dimension_numbers = #tpu.dot_dimension_numbers<[2], [1], [1], [2], [0, 0, 0, 1, 1, 2], [0], [0]>} : vector<2x8x8xf32>, vector<2x8x8xf32>, vector<2x8x8xf32> -> vector<2x8x8xf32>
    "tpu.trace_stop"() : () -> ()
    %87 = vector.shape_cast %86 : vector<2x8x8xf32> to vector<16x8xf32>
    %88 = vector.extract_strided_slice %15 {offsets = [24, 0], sizes = [8, 32], strides = [1, 1]} : vector<32x32xf32> to vector<8x32xf32>
    %cst_28 = arith.constant dense<0.000000e+00> : vector<16x32xf32>
    %89 = tpu.matmul %87, %88, %cst_28 {dimension_numbers = #tpu.dot_dimension_numbers<[1], [0], [0], [1], [0, 0, 1, 1], [], []>} : vector<16x8xf32>, vector<8x32xf32>, vector<16x32xf32> -> vector<16x32xf32>
    %90 = arith.addf %71, %89 : vector<16x32xf32>
    %c0_29 = arith.constant 0 : index
    %c0_30 = arith.constant 0 : index
    %91 = vector.load %arg5[%c0_29, %c0_30] : memref<1x32xf32, #tpu.memory_space<vmem>>, vector<1x32xf32>
    %92 = vector.broadcast %91 : vector<1x32xf32> to vector<16x32xf32>
    %93 = arith.addf %90, %92 : vector<16x32xf32>
    %94 = vector.shape_cast %93 : vector<16x32xf32> to vector<2x8x32xf32>
    %c0_31 = arith.constant 0 : index
    %c0_32 = arith.constant 0 : index
    %c0_33 = arith.constant 0 : index
    %95 = vector.load %arg6[%c0_31, %c0_32, %c0_33] : memref<2x8x32xf32, #tpu.memory_space<vmem>>, vector<2x8x32xf32>
    tpu.vector_store %arg6[%c0_31, %c0_32, %c0_33], %94 {strides = array<i32>} : memref<2x8x32xf32, #tpu.memory_space<vmem>>, vector<2x8x32xf32>,
    return
  }
  func.func @transform_0(%arg0: i32) -> (i32, i32, i32) {
    %c0_i32 = arith.constant 0 : i32
    %c0_i32_0 = arith.constant 0 : i32
    %c0_i32_1 = arith.constant 0 : i32
    return %arg0, %c0_i32, %c0_i32_0 : i32, i32, i32
  }
  func.func @transform_1(%arg0: i32) -> (i32, i32) {
    %c0_i32 = arith.constant 0 : i32
    %c0_i32_0 = arith.constant 0 : i32
    %c0_i32_1 = arith.constant 0 : i32
    return %c0_i32, %c0_i32_0 : i32, i32
  }
  func.func @transform_2(%arg0: i32) -> (i32, i32) {
    %c0_i32 = arith.constant 0 : i32
    %c0_i32_0 = arith.constant 0 : i32
    %c0_i32_1 = arith.constant 0 : i32
    return %c0_i32, %c0_i32_0 : i32, i32
  }
  func.func @transform_3(%arg0: i32) -> (i32, i32) {
    %c0_i32 = arith.constant 0 : i32
    %c0_i32_0 = arith.constant 0 : i32
    %c0_i32_1 = arith.constant 0 : i32
    return %c0_i32, %c0_i32_0 : i32, i32
  }
  func.func @transform_4(%arg0: i32) -> (i32, i32) {
    %c0_i32 = arith.constant 0 : i32
    %c0_i32_0 = arith.constant 0 : i32
    %c0_i32_1 = arith.constant 0 : i32
    return %c0_i32, %c0_i32_0 : i32, i32
  }
  func.func @transform_5(%arg0: i32) -> (i32, i32, i32) {
    %c0_i32 = arith.constant 0 : i32
    %c0_i32_0 = arith.constant 0 : i32
    %c0_i32_1 = arith.constant 0 : i32
    return %arg0, %c0_i32, %c0_i32_0 : i32, i32, i32
  }
}

</mosaic_0001>

<llo_original>
// kernel: tpu_custom_call.1
$region0: #{tpu_custom_call.1}
  #allocation0 [shape = 'u32[]', space=smem, size = 0x4, offset = 0x4, fixed_abs, tag = 'smem constant byte address 0x4 - core index']
  #allocation1 [shape = 'u32[144,128]{1,0:T(1,128)}', space=vmem, size = 0x12000, scoped, tag = 'internal scratch']
  %s0 = inlined_call_operand.hbm [shape: f32[2,8,32], index: 0, kind: input, shape index: {}]
  %s1 = inlined_call_operand.hbm [shape: f32[32,96], index: 1, kind: input, shape index: {}]
  %s2 = inlined_call_operand.vmem [shape: f32[1,96], index: 2, kind: input, shape index: {}]
  %s3 = inlined_call_operand.hbm [shape: f32[32,32], index: 3, kind: input, shape index: {}]
  %s4 = inlined_call_operand.vmem [shape: f32[1,32], index: 4, kind: input, shape index: {}]
  %s5 = inlined_call_operand.hbm [shape: f32[2,8,32], index: 5, kind: output, shape index: {}]
  %s6 = sld [smem:[#allocation0]]
  $region42: #{tpu_custom_call.1} parent=0
    _
  %s8 = ssub.s32 1, %s6
  %s9 = scalar_select 0, %s8, %s6
  $region1: #{tpu_custom_call.1} parent=0
    #allocation2 [shape = 'u8[8192]{0}', space=vmem, size = 0x2000, scoped, tag = 'input window, operand 0, single buffered']
    #allocation3 [shape = 's32[1]{0}', space=sflag, size = 0x4, scoped, tag = 'scoped memory for tpu_custom_call.1']
    #allocation4 [shape = 's32[1]{0}', space=sflag, size = 0x4, scoped, tag = 'scoped memory for tpu_custom_call.1']
    #allocation5 [shape = 'u8[16384]{0}', space=vmem, size = 0x4000, scoped, tag = 'input window, operand 1, single buffered']
    #allocation6 [shape = 's32[1]{0}', space=sflag, size = 0x4, scoped, tag = 'scoped memory for tpu_custom_call.1']
    #allocation7 [shape = 'u8[16384]{0}', space=vmem, size = 0x4000, scoped, tag = 'input window, operand 3, single buffered']
    #allocation8 [shape = 'u8[8192]{0}', space=vmem, size = 0x2000, scoped, tag = 'output window, operand 0, single buffered']
    %10 = vsyncpa [#allocation3], 0
    %11 = vsyncpa [#allocation6], 0
    %12 = vsyncpa [#allocation4], 0
    // Predicated region
    $region2: #{tpu_custom_call.1} parent=1 // pred_check
      _
    $region3: #{tpu_custom_call.1} parent=1 // pred_check_branch
      %14 = sbr.rel (0) target = $region5
    $region4: #{tpu_custom_call.1} parent=1 // pred_region
      %s16 = ssub.s32 256, 256
      %17 = vsyncadd [#allocation3], %s16
      %s18 = sshll.u32 [#allocation2], 4
      %s19 = int_to_ptr.vmem [resolvable:$true] %s18
      %24 = dma.hbm_to_vmem [thread:$0]  %s0, 256, %s19, [#allocation3], 128, 128, 8
    $region5: #{tpu_custom_call.1} parent=1 // pred_fallthru
      _
    // Predicated region
    $region6: #{tpu_custom_call.1} parent=1 // pred_check
      _
    $region7: #{tpu_custom_call.1} parent=1 // pred_check_branch
      %26 = sbr.rel (0) target = $region9
    $region8: #{tpu_custom_call.1} parent=1 // pred_region
      %s28 = ssub.s32 512, 512
      %29 = vsyncadd [#allocation6], %s28
      %s30 = sshll.u32 [#allocation5], 4
      %s31 = int_to_ptr.vmem [resolvable:$true] %s30
      %36 = dma.hbm_to_vmem [thread:$0]  %s1, 512, %s31, [#allocation6], 128, 128, 8
    $region9: #{tpu_custom_call.1} parent=1 // pred_fallthru
      _
    // Predicated region
    $region10: #{tpu_custom_call.1} parent=1 // pred_check
      _
    $region11: #{tpu_custom_call.1} parent=1 // pred_check_branch
      %38 = sbr.rel (0) target = $region13
    $region12: #{tpu_custom_call.1} parent=1 // pred_region
      _
    $region13: #{tpu_custom_call.1} parent=1 // pred_fallthru
      _
    // Predicated region
    $region14: #{tpu_custom_call.1} parent=1 // pred_check
      _
    $region15: #{tpu_custom_call.1} parent=1 // pred_check_branch
      %40 = sbr.rel (0) target = $region17
    $region16: #{tpu_custom_call.1} parent=1 // pred_region
      %s42 = ssub.s32 512, 512
      %43 = vsyncadd [#allocation6], %s42
      %s44 = sshll.u32 [#allocation7], 4
      %s45 = int_to_ptr.vmem [resolvable:$true] %s44
      %50 = dma.hbm_to_vmem [thread:$0]  %s3, 512, %s45, [#allocation6], 128, 128, 8
    $region17: #{tpu_custom_call.1} parent=1 // pred_fallthru
      _
    // Predicated region
    $region18: #{tpu_custom_call.1} parent=1 // pred_check
      _
    $region19: #{tpu_custom_call.1} parent=1 // pred_check_branch
      %52 = sbr.rel (0) target = $region21
    $region20: #{tpu_custom_call.1} parent=1 // pred_region
      _
    $region21: #{tpu_custom_call.1} parent=1 // pred_fallthru
      _
    // Predicated region
    $region22: #{tpu_custom_call.1} parent=1 // pred_check
      _
    $region23: #{tpu_custom_call.1} parent=1 // pred_check_branch
      %54 = sbr.rel (0) target = $region25
    $region24: #{tpu_custom_call.1} parent=1 // pred_region
      %55 = dma.done [#allocation3], 256
    $region25: #{tpu_custom_call.1} parent=1 // pred_fallthru
      _
    // Predicated region
    $region26: #{tpu_custom_call.1} parent=1 // pred_check
      _
    $region27: #{tpu_custom_call.1} parent=1 // pred_check_branch
      %57 = sbr.rel (0) target = $region29
    $region28: #{tpu_custom_call.1} parent=1 // pred_region
      %58 = dma.done [#allocation6], 512
    $region29: #{tpu_custom_call.1} parent=1 // pred_fallthru
      _
    // Predicated region
    $region30: #{tpu_custom_call.1} parent=1 // pred_check
      _
    $region31: #{tpu_custom_call.1} parent=1 // pred_check_branch
      %60 = sbr.rel (0) target = $region33
    $region32: #{tpu_custom_call.1} parent=1 // pred_region
      %61 = dma.done [#allocation6], 512
    $region33: #{tpu_custom_call.1} parent=1 // pred_fallthru
      _
    %v62 = vld [vmem:[#allocation2] sm:$0xff]
    %v63 = vld [vmem:[#allocation2 + $0x8] sm:$0xff]
    %v64 = vld [vmem:[#allocation5] sm:$0xff]
    %v65 = vld [vmem:[#allocation5 + $0x8] sm:$0xff]
    %v66 = vld [vmem:[#allocation5 + $0x10] sm:$0xff]
    %v67 = vld [vmem:[#allocation5 + $0x18] sm:$0xff]
    %v68 = vld [vmem:[%s2] sm:$0x1]
    %v70 = vlaneseq
    %v71 = vshrl.u32 %v70, 7
    %v72 = vsub.s32 0, %v71
    %v73 = vrot.slane %v68, %v72
    %vm75 = vcmask 261120
    %v77 = vsel %vm75, %v62, 0
    %v80 = vsel %vm75, %v63, 0
    %82 = vmatprep.subr.mxu0 0.0
    %83 = vmatpush1.msra.mxu0 %v64
    %84 = vmatprep.subr.mxu0 0.0
    %85 = vmatpush1.msra.mxu0 %v65
    %86 = vmatprep.subr.mxu0 0.0
    %87 = vmatpush1.msra.mxu0 %v66
    %88 = vmatprep.subr.mxu0 0.0
    %89 = vmatpush1.msra.mxu0 %v67
    %90 = vmatprep.subr.mxu0 0.0
    %91 = vmatpush1.msra.mxu0 0.0
    %92 = vmatprep.subr.mxu0 0.0
    %93 = vmatpush1.msra.mxu0 0.0
    %94 = vmatprep.subr.mxu0 0.0
    %95 = vmatpush1.msra.mxu0 0.0
    %96 = vmatprep.subr.mxu0 0.0
    %97 = vmatpush1.msra.mxu0 0.0
    %98 = vmatprep.subr.mxu0 0.0
    %99 = vmatpush1.msra.mxu0 0.0
    %100 = vmatprep.subr.mxu0 0.0
    %101 = vmatpush1.msra.mxu0 0.0
    %102 = vmatprep.subr.mxu0 0.0
    %103 = vmatpush1.msra.mxu0 0.0
    %104 = vmatprep.subr.mxu0 0.0
    %105 = vmatpush1.msra.mxu0 0.0
    %106 = vmatprep.subr.mxu0 0.0
    %107 = vmatpush1.msra.mxu0 0.0
    %108 = vmatprep.subr.mxu0 0.0
    %109 = vmatpush1.msra.mxu0 0.0
    %110 = vmatprep.subr.mxu0 0.0
    %111 = vmatpush1.msra.mxu0 0.0
    %112 = vmatprep.subr.mxu0 0.0
    %113 = vmatpush1.msra.mxu0 0.0
    %114 = vmatprep.subr.mxu0 0.0
    %115 = vmatpush1.msra.mxu0 0.0
    %116 = vmatprep.subr.mxu0 0.0
    %117 = vmatpush1.msra.mxu0 0.0
    %118 = vmatprep.subr.mxu0 0.0
    %119 = vmatpush1.msra.mxu0 0.0
    %120 = vmatprep.subr.mxu0 0.0
    %121 = vmatpush1.msra.mxu0 0.0
    %122 = vmatprep.subr.mxu0 0.0
    %123 = vmatpush1.msra.mxu0 0.0
    %124 = vmatprep.subr.mxu0 0.0
    %125 = vmatpush1.msra.mxu0 0.0
    %126 = vmatprep.subr.mxu0 0.0
    %127 = vmatpush1.msra.mxu0 0.0
    %128 = vmatprep.subr.mxu0 0.0
    %129 = vmatpush1.msra.mxu0 0.0
    %130 = vmatprep.subr.mxu0 0.0
    %131 = vmatpush1.msra.mxu0 0.0
    %132 = vmatprep.subr.mxu0 0.0
    %133 = vmatpush1.msra.mxu0 0.0
    %134 = vmatprep.subr.mxu0 0.0
    %135 = vmatpush1.msra.mxu0 0.0
    %136 = vmatprep.subr.mxu0 0.0
    %137 = vmatpush1.msra.mxu0 0.0
    %138 = vmatprep.subr.mxu0 0.0
    %139 = vmatpush1.msra.mxu0 0.0
    %140 = vmatprep.subr.mxu0 0.0
    %141 = vmatpush1.msra.mxu0 0.0
    %142 = vmatprep.subr.mxu0 0.0
    %143 = vmatpush1.msra.mxu0 0.0
    %144 = vmatprep.subr.mxu0 0.0
    %145 = vmatpush1.msra.mxu0 0.0
    %146 = vmatprep.mubr.f32.mxu0 0.0
    %147 = vmatmul.mubr.f32.gmra.mrb[0].mxu0 %v77
    %v148 = vpop.f32.mrb[0].mxu0
    %v149 = vadd.f32 %v73, %v148
    %v150 = vpop.f32.mrb[0].mxu0
    %151 = vmatprep.mubr.f32.mxu0 0.0
    %152 = vmatmul.mubr.f32.gmra.mrb[0].mxu0 %v80
    %v153 = vpop.f32.mrb[0].mxu0
    %v154 = vadd.f32 %v73, %v153
    %v155 = vpop.f32.mrb[0].mxu0
    %156 = vdwg.mxu0
    %v157 = vmul.f32 %v149, 0.35355338
    %v158 = vmul.f32 %v154, 0.35355338
    %v159 = vld [vmem:[#allocation7] sm:$0xff]
    %v160 = vld [vmem:[#allocation7 + $0x8] sm:$0xff]
    %v161 = vld [vmem:[#allocation7 + $0x10] sm:$0xff]
    %v162 = vld [vmem:[#allocation7 + $0x18] sm:$0xff]
    %164 = vrot.lane.b32.xlu0 %v149, 96
    %v165 = vpop.permute.xlu0 %164
    %vm166 = vcmask 64512
    %v168 = vsel %vm166, %v157, 0
    %v170 = vsel %vm166, %v165, 0
    %172 = vmatprep.subr.mxu0 0.0
    %173 = vmatpush1.xpose.msra.mxu0 %v170
    %174 = vmatprep.subr.mxu0 0.0
    %175 = vmatpush1.xpose.msra.mxu0 0.0
    %176 = vmatprep.subr.mxu0 0.0
    %177 = vmatpush1.xpose.msra.mxu0 0.0
    %178 = vmatprep.subr.mxu0 0.0
    %179 = vmatpush1.xpose.msra.mxu0 0.0
    %180 = vmatprep.subr.mxu0 0.0
    %181 = vmatpush1.xpose.msra.mxu0 0.0
    %182 = vmatprep.subr.mxu0 0.0
    %183 = vmatpush1.xpose.msra.mxu0 0.0
    %184 = vmatprep.subr.mxu0 0.0
    %185 = vmatpush1.xpose.msra.mxu0 0.0
    %186 = vmatprep.subr.mxu0 0.0
    %187 = vmatpush1.xpose.msra.mxu0 0.0
    %188 = vmatprep.subr.mxu0 0.0
    %189 = vmatpush1.xpose.msra.mxu0 0.0
    %190 = vmatprep.subr.mxu0 0.0
    %191 = vmatpush1.xpose.msra.mxu0 0.0
    %192 = vmatprep.subr.mxu0 0.0
    %193 = vmatpush1.xpose.msra.mxu0 0.0
    %194 = vmatprep.subr.mxu0 0.0
    %195 = vmatpush1.xpose.msra.mxu0 0.0
    %196 = vmatprep.subr.mxu0 0.0
    %197 = vmatpush1.xpose.msra.mxu0 0.0
    %198 = vmatprep.subr.mxu0 0.0
    %199 = vmatpush1.xpose.msra.mxu0 0.0
    %200 = vmatprep.subr.mxu0 0.0
    %201 = vmatpush1.xpose.msra.mxu0 0.0
    %202 = vmatprep.subr.mxu0 0.0
    %203 = vmatpush1.xpose.msra.mxu0 0.0
    %204 = vmatprep.subr.mxu0 0.0
    %205 = vmatpush1.xpose.msra.mxu0 0.0
    %206 = vmatprep.subr.mxu0 0.0
    %207 = vmatpush1.xpose.msra.mxu0 0.0
    %208 = vmatprep.subr.mxu0 0.0
    %209 = vmatpush1.xpose.msra.mxu0 0.0
    %210 = vmatprep.subr.mxu0 0.0
    %211 = vmatpush1.xpose.msra.mxu0 0.0
    %212 = vmatprep.subr.mxu0 0.0
    %213 = vmatpush1.xpose.msra.mxu0 0.0
    %214 = vmatprep.subr.mxu0 0.0
    %215 = vmatpush1.xpose.msra.mxu0 0.0
    %216 = vmatprep.subr.mxu0 0.0
    %217 = vmatpush1.xpose.msra.mxu0 0.0
    %218 = vmatprep.subr.mxu0 0.0
    %219 = vmatpush1.xpose.msra.mxu0 0.0
    %220 = vmatprep.subr.mxu0 0.0
    %221 = vmatpush1.xpose.msra.mxu0 0.0
    %222 = vmatprep.subr.mxu0 0.0
    %223 = vmatpush1.xpose.msra.mxu0 0.0
    %224 = vmatprep.subr.mxu0 0.0
    %225 = vmatpush1.xpose.msra.mxu0 0.0
    %226 = vmatprep.subr.mxu0 0.0
    %227 = vmatpush1.xpose.msra.mxu0 0.0
    %228 = vmatprep.subr.mxu0 0.0
    %229 = vmatpush1.xpose.msra.mxu0 0.0
    %230 = vmatprep.subr.mxu0 0.0
    %231 = vmatpush1.xpose.msra.mxu0 0.0
    %232 = vmatprep.subr.mxu0 0.0
    %233 = vmatpush1.xpose.msra.mxu0 0.0
    %234 = vmatprep.subr.mxu0 0.0
    %235 = vmatpush1.xpose.msra.mxu0 0.0
    %236 = vmatprep.mubr.f32.mxu0 0.0
    %237 = vmatmul.mubr.f32.gmra.mrb[0].mxu0 %v168
    %v238 = vpop.f32.mrb[0].mxu0
    %v239 = vadd.f32 0.0, %v238
    %v240 = vpop.f32.mrb[0].mxu0
    %241 = vdwg.mxu0
    %243 = vrot.lane.b32.xlu0 %v154, 96
    %v244 = vpop.permute.xlu0 %243
    %v246 = vsel %vm166, %v158, 0
    %v248 = vsel %vm166, %v244, 0
    %250 = vmatprep.subr.mxu0 0.0
    %251 = vmatpush1.xpose.msra.mxu0 %v248
    %252 = vmatprep.subr.mxu0 0.0
    %253 = vmatpush1.xpose.msra.mxu0 0.0
    %254 = vmatprep.subr.mxu0 0.0
    %255 = vmatpush1.xpose.msra.mxu0 0.0
    %256 = vmatprep.subr.mxu0 0.0
    %257 = vmatpush1.xpose.msra.mxu0 0.0
    %258 = vmatprep.subr.mxu0 0.0
    %259 = vmatpush1.xpose.msra.mxu0 0.0
    %260 = vmatprep.subr.mxu0 0.0
    %261 = vmatpush1.xpose.msra.mxu0 0.0
    %262 = vmatprep.subr.mxu0 0.0
    %263 = vmatpush1.xpose.msra.mxu0 0.0
    %264 = vmatprep.subr.mxu0 0.0
    %265 = vmatpush1.xpose.msra.mxu0 0.0
    %266 = vmatprep.subr.mxu0 0.0
    %267 = vmatpush1.xpose.msra.mxu0 0.0
    %268 = vmatprep.subr.mxu0 0.0
    %269 = vmatpush1.xpose.msra.mxu0 0.0
    %270 = vmatprep.subr.mxu0 0.0
    %271 = vmatpush1.xpose.msra.mxu0 0.0
    %272 = vmatprep.subr.mxu0 0.0
    %273 = vmatpush1.xpose.msra.mxu0 0.0
    %274 = vmatprep.subr.mxu0 0.0
    %275 = vmatpush1.xpose.msra.mxu0 0.0
    %276 = vmatprep.subr.mxu0 0.0
    %277 = vmatpush1.xpose.msra.mxu0 0.0
    %278 = vmatprep.subr.mxu0 0.0
    %279 = vmatpush1.xpose.msra.mxu0 0.0
    %280 = vmatprep.subr.mxu0 0.0
    %281 = vmatpush1.xpose.msra.mxu0 0.0
    %282 = vmatprep.subr.mxu0 0.0
    %283 = vmatpush1.xpose.msra.mxu0 0.0
    %284 = vmatprep.subr.mxu0 0.0
    %285 = vmatpush1.xpose.msra.mxu0 0.0
    %286 = vmatprep.subr.mxu0 0.0
    %287 = vmatpush1.xpose.msra.mxu0 0.0
    %288 = vmatprep.subr.mxu0 0.0
    %289 = vmatpush1.xpose.msra.mxu0 0.0
    %290 = vmatprep.subr.mxu0 0.0
    %291 = vmatpush1.xpose.msra.mxu0 0.0
    %292 = vmatprep.subr.mxu0 0.0
    %293 = vmatpush1.xpose.msra.mxu0 0.0
    %294 = vmatprep.subr.mxu0 0.0
    %295 = vmatpush1.xpose.msra.mxu0 0.0
    %296 = vmatprep.subr.mxu0 0.0
    %297 = vmatpush1.xpose.msra.mxu0 0.0
    %298 = vmatprep.subr.mxu0 0.0
    %299 = vmatpush1.xpose.msra.mxu0 0.0
    %300 = vmatprep.subr.mxu0 0.0
    %301 = vmatpush1.xpose.msra.mxu0 0.0
    %302 = vmatprep.subr.mxu0 0.0
    %303 = vmatpush1.xpose.msra.mxu0 0.0
    %304 = vmatprep.subr.mxu0 0.0
    %305 = vmatpush1.xpose.msra.mxu0 0.0
    %306 = vmatprep.subr.mxu0 0.0
    %307 = vmatpush1.xpose.msra.mxu0 0.0
    %308 = vmatprep.subr.mxu0 0.0
    %309 = vmatpush1.xpose.msra.mxu0 0.0
    %310 = vmatprep.subr.mxu0 0.0
    %311 = vmatpush1.xpose.msra.mxu0 0.0
    %312 = vmatprep.subr.mxu0 0.0
    %313 = vmatpush1.xpose.msra.mxu0 0.0
    %314 = vmatprep.mubr.f32.mxu0 0.0
    %315 = vmatmul.mubr.f32.gmra.mrb[0].mxu0 %v246
    %v316 = vpop.f32.mrb[0].mxu0
    %v317 = vadd.f32 0.0, %v316
    %v318 = vpop.f32.mrb[0].mxu0
    %319 = vdwg.mxu0
    %v320 = vsel %vm166, %v239, -inf
    %321 = vmax.xlane.f32.xlu0 %v320
    %v322 = vpop.xlane.xlu0 %321
    %v323 = vsel %vm166, %v317, -inf
    %324 = vmax.xlane.f32.xlu0 %v323
    %v325 = vpop.xlane.xlu0 %324
    %v326 = vsub.f32 %v239, %v322
    %v327 = vsub.f32 %v317, %v325
    %v328 = vmul.f32 %v326, 1.442695
    %v329 = vpow.pop %v328
    %v330 = vmul.f32 %v327, 1.442695
    %v331 = vpow.pop %v330
    %v332 = vsel %vm166, %v329, 0.0
    %333 = vadd.xlane.f32.xlu0 %v332
    %v334 = vpop.xlane.xlu0 %333
    %v335 = vsel %vm166, %v331, 0.0
    %336 = vadd.xlane.f32.xlu0 %v335
    %v337 = vpop.xlane.xlu0 %336
    %v338 = vrcp.pop %v334
    %v339 = vrcp.pop %v337
    %v340 = vmul.f32 %v329, %v338
    %v341 = vmul.f32 %v331, %v339
    %342 = vrot.lane.b32.xlu0 %v149, 64
    %v343 = vpop.permute.xlu0 %342
    %v346 = vsel %vm166, %v340, 0
    %348 = vmatprep.subr.mxu0 0.0
    %349 = vmatpush1.msra.mxu0 %v343
    %350 = vmatprep.subr.mxu0 0.0
    %351 = vmatpush1.msra.mxu0 0.0
    %352 = vmatprep.subr.mxu0 0.0
    %353 = vmatpush1.msra.mxu0 0.0
    %354 = vmatprep.subr.mxu0 0.0
    %355 = vmatpush1.msra.mxu0 0.0
    %356 = vmatprep.subr.mxu0 0.0
    %357 = vmatpush1.msra.mxu0 0.0
    %358 = vmatprep.subr.mxu0 0.0
    %359 = vmatpush1.msra.mxu0 0.0
    %360 = vmatprep.subr.mxu0 0.0
    %361 = vmatpush1.msra.mxu0 0.0
    %362 = vmatprep.subr.mxu0 0.0
    %363 = vmatpush1.msra.mxu0 0.0
    %364 = vmatprep.subr.mxu0 0.0
    %365 = vmatpush1.msra.mxu0 0.0
    %366 = vmatprep.subr.mxu0 0.0
    %367 = vmatpush1.msra.mxu0 0.0
    %368 = vmatprep.subr.mxu0 0.0
    %369 = vmatpush1.msra.mxu0 0.0
    %370 = vmatprep.subr.mxu0 0.0
    %371 = vmatpush1.msra.mxu0 0.0
    %372 = vmatprep.subr.mxu0 0.0
    %373 = vmatpush1.msra.mxu0 0.0
    %374 = vmatprep.subr.mxu0 0.0
    %375 = vmatpush1.msra.mxu0 0.0
    %376 = vmatprep.subr.mxu0 0.0
    %377 = vmatpush1.msra.mxu0 0.0
    %378 = vmatprep.subr.mxu0 0.0
    %379 = vmatpush1.msra.mxu0 0.0
    %380 = vmatprep.subr.mxu0 0.0
    %381 = vmatpush1.msra.mxu0 0.0
    %382 = vmatprep.subr.mxu0 0.0
    %383 = vmatpush1.msra.mxu0 0.0
    %384 = vmatprep.subr.mxu0 0.0
    %385 = vmatpush1.msra.mxu0 0.0
    %386 = vmatprep.subr.mxu0 0.0
    %387 = vmatpush1.msra.mxu0 0.0
    %388 = vmatprep.subr.mxu0 0.0
    %389 = vmatpush1.msra.mxu0 0.0
    %390 = vmatprep.subr.mxu0 0.0
    %391 = vmatpush1.msra.mxu0 0.0
    %392 = vmatprep.subr.mxu0 0.0
    %393 = vmatpush1.msra.mxu0 0.0
    %394 = vmatprep.subr.mxu0 0.0
    %395 = vmatpush1.msra.mxu0 0.0
    %396 = vmatprep.subr.mxu0 0.0
    %397 = vmatpush1.msra.mxu0 0.0
    %398 = vmatprep.subr.mxu0 0.0
    %399 = vmatpush1.msra.mxu0 0.0
    %400 = vmatprep.subr.mxu0 0.0
    %401 = vmatpush1.msra.mxu0 0.0
    %402 = vmatprep.subr.mxu0 0.0
    %403 = vmatpush1.msra.mxu0 0.0
    %404 = vmatprep.subr.mxu0 0.0
    %405 = vmatpush1.msra.mxu0 0.0
    %406 = vmatprep.subr.mxu0 0.0
    %407 = vmatpush1.msra.mxu0 0.0
    %408 = vmatprep.subr.mxu0 0.0
    %409 = vmatpush1.msra.mxu0 0.0
    %410 = vmatprep.subr.mxu0 0.0
    %411 = vmatpush1.msra.mxu0 0.0
    %412 = vmatprep.mubr.f32.mxu0 0.0
    %413 = vmatmul.mubr.f32.gmra.mrb[0].mxu0 %v346
    %v414 = vpop.f32.mrb[0].mxu0
    %v415 = vadd.f32 0.0, %v414
    %v416 = vpop.f32.mrb[0].mxu0
    %417 = vdwg.mxu0
    %418 = vrot.lane.b32.xlu0 %v154, 64
    %v419 = vpop.permute.xlu0 %418
    %v422 = vsel %vm166, %v341, 0
    %424 = vmatprep.subr.mxu0 0.0
    %425 = vmatpush1.msra.mxu0 %v419
    %426 = vmatprep.subr.mxu0 0.0
    %427 = vmatpush1.msra.mxu0 0.0
    %428 = vmatprep.subr.mxu0 0.0
    %429 = vmatpush1.msra.mxu0 0.0
    %430 = vmatprep.subr.mxu0 0.0
    %431 = vmatpush1.msra.mxu0 0.0
    %432 = vmatprep.subr.mxu0 0.0
    %433 = vmatpush1.msra.mxu0 0.0
    %434 = vmatprep.subr.mxu0 0.0
    %435 = vmatpush1.msra.mxu0 0.0
    %436 = vmatprep.subr.mxu0 0.0
    %437 = vmatpush1.msra.mxu0 0.0
    %438 = vmatprep.subr.mxu0 0.0
    %439 = vmatpush1.msra.mxu0 0.0
    %440 = vmatprep.subr.mxu0 0.0
    %441 = vmatpush1.msra.mxu0 0.0
    %442 = vmatprep.subr.mxu0 0.0
    %443 = vmatpush1.msra.mxu0 0.0
    %444 = vmatprep.subr.mxu0 0.0
    %445 = vmatpush1.msra.mxu0 0.0
    %446 = vmatprep.subr.mxu0 0.0
    %447 = vmatpush1.msra.mxu0 0.0
    %448 = vmatprep.subr.mxu0 0.0
    %449 = vmatpush1.msra.mxu0 0.0
    %450 = vmatprep.subr.mxu0 0.0
    %451 = vmatpush1.msra.mxu0 0.0
    %452 = vmatprep.subr.mxu0 0.0
    %453 = vmatpush1.msra.mxu0 0.0
    %454 = vmatprep.subr.mxu0 0.0
    %455 = vmatpush1.msra.mxu0 0.0
    %456 = vmatprep.subr.mxu0 0.0
    %457 = vmatpush1.msra.mxu0 0.0
    %458 = vmatprep.subr.mxu0 0.0
    %459 = vmatpush1.msra.mxu0 0.0
    %460 = vmatprep.subr.mxu0 0.0
    %461 = vmatpush1.msra.mxu0 0.0
    %462 = vmatprep.subr.mxu0 0.0
    %463 = vmatpush1.msra.mxu0 0.0
    %464 = vmatprep.subr.mxu0 0.0
    %465 = vmatpush1.msra.mxu0 0.0
    %466 = vmatprep.subr.mxu0 0.0
    %467 = vmatpush1.msra.mxu0 0.0
    %468 = vmatprep.subr.mxu0 0.0
    %469 = vmatpush1.msra.mxu0 0.0
    %470 = vmatprep.subr.mxu0 0.0
    %471 = vmatpush1.msra.mxu0 0.0
    %472 = vmatprep.subr.mxu0 0.0
    %473 = vmatpush1.msra.mxu0 0.0
    %474 = vmatprep.subr.mxu0 0.0
    %475 = vmatpush1.msra.mxu0 0.0
    %476 = vmatprep.subr.mxu0 0.0
    %477 = vmatpush1.msra.mxu0 0.0
    %478 = vmatprep.subr.mxu0 0.0
    %479 = vmatpush1.msra.mxu0 0.0
    %480 = vmatprep.subr.mxu0 0.0
    %481 = vmatpush1.msra.mxu0 0.0
    %482 = vmatprep.subr.mxu0 0.0
    %483 = vmatpush1.msra.mxu0 0.0
    %484 = vmatprep.subr.mxu0 0.0
    %485 = vmatpush1.msra.mxu0 0.0
    %486 = vmatprep.subr.mxu0 0.0
    %487 = vmatpush1.msra.mxu0 0.0
    %488 = vmatprep.mubr.f32.mxu0 0.0
    %489 = vmatmul.mubr.f32.gmra.mrb[0].mxu0 %v422
    %v490 = vpop.f32.mrb[0].mxu0
    %v491 = vadd.f32 0.0, %v490
    %v492 = vpop.f32.mrb[0].mxu0
    %493 = vdwg.mxu0
    %494 = vrot.lane.b32.xlu0 %v157, 120
    %v495 = vpop.permute.xlu0 %494
    %496 = vrot.lane.b32.xlu0 %v149, 88
    %v497 = vpop.permute.xlu0 %496
    %v498 = vsel %vm166, %v495, 0
    %v500 = vsel %vm166, %v497, 0
    %502 = vmatprep.subr.mxu0 0.0
    %503 = vmatpush1.xpose.msra.mxu0 %v500
    %504 = vmatprep.subr.mxu0 0.0
    %505 = vmatpush1.xpose.msra.mxu0 0.0
    %506 = vmatprep.subr.mxu0 0.0
    %507 = vmatpush1.xpose.msra.mxu0 0.0
    %508 = vmatprep.subr.mxu0 0.0
    %509 = vmatpush1.xpose.msra.mxu0 0.0
    %510 = vmatprep.subr.mxu0 0.0
    %511 = vmatpush1.xpose.msra.mxu0 0.0
    %512 = vmatprep.subr.mxu0 0.0
    %513 = vmatpush1.xpose.msra.mxu0 0.0
    %514 = vmatprep.subr.mxu0 0.0
    %515 = vmatpush1.xpose.msra.mxu0 0.0
    %516 = vmatprep.subr.mxu0 0.0
    %517 = vmatpush1.xpose.msra.mxu0 0.0
    %518 = vmatprep.subr.mxu0 0.0
    %519 = vmatpush1.xpose.msra.mxu0 0.0
    %520 = vmatprep.subr.mxu0 0.0
    %521 = vmatpush1.xpose.msra.mxu0 0.0
    %522 = vmatprep.subr.mxu0 0.0
    %523 = vmatpush1.xpose.msra.mxu0 0.0
    %524 = vmatprep.subr.mxu0 0.0
    %525 = vmatpush1.xpose.msra.mxu0 0.0
    %526 = vmatprep.subr.mxu0 0.0
    %527 = vmatpush1.xpose.msra.mxu0 0.0
    %528 = vmatprep.subr.mxu0 0.0
    %529 = vmatpush1.xpose.msra.mxu0 0.0
    %530 = vmatprep.subr.mxu0 0.0
    %531 = vmatpush1.xpose.msra.mxu0 0.0
    %532 = vmatprep.subr.mxu0 0.0
    %533 = vmatpush1.xpose.msra.mxu0 0.0
    %534 = vmatprep.subr.mxu0 0.0
    %535 = vmatpush1.xpose.msra.mxu0 0.0
    %536 = vmatprep.subr.mxu0 0.0
    %537 = vmatpush1.xpose.msra.mxu0 0.0
    %538 = vmatprep.subr.mxu0 0.0
    %539 = vmatpush1.xpose.msra.mxu0 0.0
    %540 = vmatprep.subr.mxu0 0.0
    %541 = vmatpush1.xpose.msra.mxu0 0.0
    %542 = vmatprep.subr.mxu0 0.0
    %543 = vmatpush1.xpose.msra.mxu0 0.0
    %544 = vmatprep.subr.mxu0 0.0
    %545 = vmatpush1.xpose.msra.mxu0 0.0
    %546 = vmatprep.subr.mxu0 0.0
    %547 = vmatpush1.xpose.msra.mxu0 0.0
    %548 = vmatprep.subr.mxu0 0.0
    %549 = vmatpush1.xpose.msra.mxu0 0.0
    %550 = vmatprep.subr.mxu0 0.0
    %551 = vmatpush1.xpose.msra.mxu0 0.0
    %552 = vmatprep.subr.mxu0 0.0
    %553 = vmatpush1.xpose.msra.mxu0 0.0
    %554 = vmatprep.subr.mxu0 0.0
    %555 = vmatpush1.xpose.msra.mxu0 0.0
    %556 = vmatprep.subr.mxu0 0.0
    %557 = vmatpush1.xpose.msra.mxu0 0.0
    %558 = vmatprep.subr.mxu0 0.0
    %559 = vmatpush1.xpose.msra.mxu0 0.0
    %560 = vmatprep.subr.mxu0 0.0
    %561 = vmatpush1.xpose.msra.mxu0 0.0
    %562 = vmatprep.subr.mxu0 0.0
    %563 = vmatpush1.xpose.msra.mxu0 0.0
    %564 = vmatprep.subr.mxu0 0.0
    %565 = vmatpush1.xpose.msra.mxu0 0.0
    %566 = vmatprep.mubr.f32.mxu0 0.0
    %567 = vmatmul.mubr.f32.gmra.mrb[0].mxu0 %v498
    %v568 = vpop.f32.mrb[0].mxu0
    %v569 = vadd.f32 0.0, %v568
    %v570 = vpop.f32.mrb[0].mxu0
    %571 = vdwg.mxu0
    %572 = vrot.lane.b32.xlu0 %v158, 120
    %v573 = vpop.permute.xlu0 %572
    %574 = vrot.lane.b32.xlu0 %v154, 88
    %v575 = vpop.permute.xlu0 %574
    %v576 = vsel %vm166, %v573, 0
    %v578 = vsel %vm166, %v575, 0
    %580 = vmatprep.subr.mxu0 0.0
    %581 = vmatpush1.xpose.msra.mxu0 %v578
    %582 = vmatprep.subr.mxu0 0.0
    %583 = vmatpush1.xpose.msra.mxu0 0.0
    %584 = vmatprep.subr.mxu0 0.0
    %585 = vmatpush1.xpose.msra.mxu0 0.0
    %586 = vmatprep.subr.mxu0 0.0
    %587 = vmatpush1.xpose.msra.mxu0 0.0
    %588 = vmatprep.subr.mxu0 0.0
    %589 = vmatpush1.xpose.msra.mxu0 0.0
    %590 = vmatprep.subr.mxu0 0.0
    %591 = vmatpush1.xpose.msra.mxu0 0.0
    %592 = vmatprep.subr.mxu0 0.0
    %593 = vmatpush1.xpose.msra.mxu0 0.0
    %594 = vmatprep.subr.mxu0 0.0
    %595 = vmatpush1.xpose.msra.mxu0 0.0
    %596 = vmatprep.subr.mxu0 0.0
    %597 = vmatpush1.xpose.msra.mxu0 0.0
    %598 = vmatprep.subr.mxu0 0.0
    %599 = vmatpush1.xpose.msra.mxu0 0.0
    %600 = vmatprep.subr.mxu0 0.0
    %601 = vmatpush1.xpose.msra.mxu0 0.0
    %602 = vmatprep.subr.mxu0 0.0
    %603 = vmatpush1.xpose.msra.mxu0 0.0
    %604 = vmatprep.subr.mxu0 0.0
    %605 = vmatpush1.xpose.msra.mxu0 0.0
    %606 = vmatprep.subr.mxu0 0.0
    %607 = vmatpush1.xpose.msra.mxu0 0.0
    %608 = vmatprep.subr.mxu0 0.0
    %609 = vmatpush1.xpose.msra.mxu0 0.0
    %610 = vmatprep.subr.mxu0 0.0
    %611 = vmatpush1.xpose.msra.mxu0 0.0
    %612 = vmatprep.subr.mxu0 0.0
    %613 = vmatpush1.xpose.msra.mxu0 0.0
    %614 = vmatprep.subr.mxu0 0.0
    %615 = vmatpush1.xpose.msra.mxu0 0.0
    %616 = vmatprep.subr.mxu0 0.0
    %617 = vmatpush1.xpose.msra.mxu0 0.0
    %618 = vmatprep.subr.mxu0 0.0
    %619 = vmatpush1.xpose.msra.mxu0 0.0
    %620 = vmatprep.subr.mxu0 0.0
    %621 = vmatpush1.xpose.msra.mxu0 0.0
    %622 = vmatprep.subr.mxu0 0.0
    %623 = vmatpush1.xpose.msra.mxu0 0.0
    %624 = vmatprep.subr.mxu0 0.0
    %625 = vmatpush1.xpose.msra.mxu0 0.0
    %626 = vmatprep.subr.mxu0 0.0
    %627 = vmatpush1.xpose.msra.mxu0 0.0
    %628 = vmatprep.subr.mxu0 0.0
    %629 = vmatpush1.xpose.msra.mxu0 0.0
    %630 = vmatprep.subr.mxu0 0.0
    %631 = vmatpush1.xpose.msra.mxu0 0.0
    %632 = vmatprep.subr.mxu0 0.0
    %633 = vmatpush1.xpose.msra.mxu0 0.0
    %634 = vmatprep.subr.mxu0 0.0
    %635 = vmatpush1.xpose.msra.mxu0 0.0
    %636 = vmatprep.subr.mxu0 0.0
    %637 = vmatpush1.xpose.msra.mxu0 0.0
    %638 = vmatprep.subr.mxu0 0.0
    %639 = vmatpush1.xpose.msra.mxu0 0.0
    %640 = vmatprep.subr.mxu0 0.0
    %641 = vmatpush1.xpose.msra.mxu0 0.0
    %642 = vmatprep.subr.mxu0 0.0
    %643 = vmatpush1.xpose.msra.mxu0 0.0
    %644 = vmatprep.mubr.f32.mxu0 0.0
    %645 = vmatmul.mubr.f32.gmra.mrb[0].mxu0 %v576
    %v646 = vpop.f32.mrb[0].mxu0
    %v647 = vadd.f32 0.0, %v646
    %v648 = vpop.f32.mrb[0].mxu0
    %649 = vdwg.mxu0
    %v650 = vsel %vm166, %v569, -inf
    %651 = vmax.xlane.f32.xlu0 %v650
    %v652 = vpop.xlane.xlu0 %651
    %v653 = vsel %vm166, %v647, -inf
    %654 = vmax.xlane.f32.xlu0 %v653
    %v655 = vpop.xlane.xlu0 %654
    %v656 = vsub.f32 %v569, %v652
    %v657 = vsub.f32 %v647, %v655
    %v658 = vmul.f32 %v656, 1.442695
    %v659 = vpow.pop %v658
    %v660 = vmul.f32 %v657, 1.442695
    %v661 = vpow.pop %v660
    %v662 = vsel %vm166, %v659, 0.0
    %663 = vadd.xlane.f32.xlu0 %v662
    %v664 = vpop.xlane.xlu0 %663
    %v665 = vsel %vm166, %v661, 0.0
    %666 = vadd.xlane.f32.xlu0 %v665
    %v667 = vpop.xlane.xlu0 %666
    %v668 = vrcp.pop %v664
    %v669 = vrcp.pop %v667
    %v670 = vmul.f32 %v659, %v668
    %v671 = vmul.f32 %v661, %v669
    %672 = vrot.lane.b32.xlu0 %v149, 56
    %v673 = vpop.permute.xlu0 %672
    %v676 = vsel %vm166, %v670, 0
    %678 = vmatprep.subr.mxu0 0.0
    %679 = vmatpush1.msra.mxu0 %v673
    %680 = vmatprep.subr.mxu0 0.0
    %681 = vmatpush1.msra.mxu0 0.0
    %682 = vmatprep.subr.mxu0 0.0
    %683 = vmatpush1.msra.mxu0 0.0
    %684 = vmatprep.subr.mxu0 0.0
    %685 = vmatpush1.msra.mxu0 0.0
    %686 = vmatprep.subr.mxu0 0.0
    %687 = vmatpush1.msra.mxu0 0.0
    %688 = vmatprep.subr.mxu0 0.0
    %689 = vmatpush1.msra.mxu0 0.0
    %690 = vmatprep.subr.mxu0 0.0
    %691 = vmatpush1.msra.mxu0 0.0
    %692 = vmatprep.subr.mxu0 0.0
    %693 = vmatpush1.msra.mxu0 0.0
    %694 = vmatprep.subr.mxu0 0.0
    %695 = vmatpush1.msra.mxu0 0.0
    %696 = vmatprep.subr.mxu0 0.0
    %697 = vmatpush1.msra.mxu0 0.0
    %698 = vmatprep.subr.mxu0 0.0
    %699 = vmatpush1.msra.mxu0 0.0
    %700 = vmatprep.subr.mxu0 0.0
    %701 = vmatpush1.msra.mxu0 0.0
    %702 = vmatprep.subr.mxu0 0.0
    %703 = vmatpush1.msra.mxu0 0.0
    %704 = vmatprep.subr.mxu0 0.0
    %705 = vmatpush1.msra.mxu0 0.0
    %706 = vmatprep.subr.mxu0 0.0
    %707 = vmatpush1.msra.mxu0 0.0
    %708 = vmatprep.subr.mxu0 0.0
    %709 = vmatpush1.msra.mxu0 0.0
    %710 = vmatprep.subr.mxu0 0.0
    %711 = vmatpush1.msra.mxu0 0.0
    %712 = vmatprep.subr.mxu0 0.0
    %713 = vmatpush1.msra.mxu0 0.0
    %714 = vmatprep.subr.mxu0 0.0
    %715 = vmatpush1.msra.mxu0 0.0
    %716 = vmatprep.subr.mxu0 0.0
    %717 = vmatpush1.msra.mxu0 0.0
    %718 = vmatprep.subr.mxu0 0.0
    %719 = vmatpush1.msra.mxu0 0.0
    %720 = vmatprep.subr.mxu0 0.0
    %721 = vmatpush1.msra.mxu0 0.0
    %722 = vmatprep.subr.mxu0 0.0
    %723 = vmatpush1.msra.mxu0 0.0
    %724 = vmatprep.subr.mxu0 0.0
    %725 = vmatpush1.msra.mxu0 0.0
    %726 = vmatprep.subr.mxu0 0.0
    %727 = vmatpush1.msra.mxu0 0.0
    %728 = vmatprep.subr.mxu0 0.0
    %729 = vmatpush1.msra.mxu0 0.0
    %730 = vmatprep.subr.mxu0 0.0
    %731 = vmatpush1.msra.mxu0 0.0
    %732 = vmatprep.subr.mxu0 0.0
    %733 = vmatpush1.msra.mxu0 0.0
    %734 = vmatprep.subr.mxu0 0.0
    %735 = vmatpush1.msra.mxu0 0.0
    %736 = vmatprep.subr.mxu0 0.0
    %737 = vmatpush1.msra.mxu0 0.0
    %738 = vmatprep.subr.mxu0 0.0
    %739 = vmatpush1.msra.mxu0 0.0
    %740 = vmatprep.subr.mxu0 0.0
    %741 = vmatpush1.msra.mxu0 0.0
    %742 = vmatprep.mubr.f32.mxu0 0.0
    %743 = vmatmul.mubr.f32.gmra.mrb[0].mxu0 %v676
    %v744 = vpop.f32.mrb[0].mxu0
    %v745 = vadd.f32 0.0, %v744
    %v746 = vpop.f32.mrb[0].mxu0
    %747 = vdwg.mxu0
    %748 = vrot.lane.b32.xlu0 %v154, 56
    %v749 = vpop.permute.xlu0 %748
    %v752 = vsel %vm166, %v671, 0
    %754 = vmatprep.subr.mxu0 0.0
    %755 = vmatpush1.msra.mxu0 %v749
    %756 = vmatprep.subr.mxu0 0.0
    %757 = vmatpush1.msra.mxu0 0.0
    %758 = vmatprep.subr.mxu0 0.0
    %759 = vmatpush1.msra.mxu0 0.0
    %760 = vmatprep.subr.mxu0 0.0
    %761 = vmatpush1.msra.mxu0 0.0
    %762 = vmatprep.subr.mxu0 0.0
    %763 = vmatpush1.msra.mxu0 0.0
    %764 = vmatprep.subr.mxu0 0.0
    %765 = vmatpush1.msra.mxu0 0.0
    %766 = vmatprep.subr.mxu0 0.0
    %767 = vmatpush1.msra.mxu0 0.0
    %768 = vmatprep.subr.mxu0 0.0
    %769 = vmatpush1.msra.mxu0 0.0
    %770 = vmatprep.subr.mxu0 0.0
    %771 = vmatpush1.msra.mxu0 0.0
    %772 = vmatprep.subr.mxu0 0.0
    %773 = vmatpush1.msra.mxu0 0.0
    %774 = vmatprep.subr.mxu0 0.0
    %775 = vmatpush1.msra.mxu0 0.0
    %776 = vmatprep.subr.mxu0 0.0
    %777 = vmatpush1.msra.mxu0 0.0
    %778 = vmatprep.subr.mxu0 0.0
    %779 = vmatpush1.msra.mxu0 0.0
    %780 = vmatprep.subr.mxu0 0.0
    %781 = vmatpush1.msra.mxu0 0.0
    %782 = vmatprep.subr.mxu0 0.0
    %783 = vmatpush1.msra.mxu0 0.0
    %784 = vmatprep.subr.mxu0 0.0
    %785 = vmatpush1.msra.mxu0 0.0
    %786 = vmatprep.subr.mxu0 0.0
    %787 = vmatpush1.msra.mxu0 0.0
    %788 = vmatprep.subr.mxu0 0.0
    %789 = vmatpush1.msra.mxu0 0.0
    %790 = vmatprep.subr.mxu0 0.0
    %791 = vmatpush1.msra.mxu0 0.0
    %792 = vmatprep.subr.mxu0 0.0
    %793 = vmatpush1.msra.mxu0 0.0
    %794 = vmatprep.subr.mxu0 0.0
    %795 = vmatpush1.msra.mxu0 0.0
    %796 = vmatprep.subr.mxu0 0.0
    %797 = vmatpush1.msra.mxu0 0.0
    %798 = vmatprep.subr.mxu0 0.0
    %799 = vmatpush1.msra.mxu0 0.0
    %800 = vmatprep.subr.mxu0 0.0
    %801 = vmatpush1.msra.mxu0 0.0
    %802 = vmatprep.subr.mxu0 0.0
    %803 = vmatpush1.msra.mxu0 0.0
    %804 = vmatprep.subr.mxu0 0.0
    %805 = vmatpush1.msra.mxu0 0.0
    %806 = vmatprep.subr.mxu0 0.0
    %807 = vmatpush1.msra.mxu0 0.0
    %808 = vmatprep.subr.mxu0 0.0
    %809 = vmatpush1.msra.mxu0 0.0
    %810 = vmatprep.subr.mxu0 0.0
    %811 = vmatpush1.msra.mxu0 0.0
    %812 = vmatprep.subr.mxu0 0.0
    %813 = vmatpush1.msra.mxu0 0.0
    %814 = vmatprep.subr.mxu0 0.0
    %815 = vmatpush1.msra.mxu0 0.0
    %816 = vmatprep.subr.mxu0 0.0
    %817 = vmatpush1.msra.mxu0 0.0
    %818 = vmatprep.mubr.f32.mxu0 0.0
    %819 = vmatmul.mubr.f32.gmra.mrb[0].mxu0 %v752
    %v820 = vpop.f32.mrb[0].mxu0
    %v821 = vadd.f32 0.0, %v820
    %v822 = vpop.f32.mrb[0].mxu0
    %823 = vdwg.mxu0
    %v825 = vsel %vm166, %v745, 0
    %v828 = vsel %vm166, %v821, 0
    %830 = vmatprep.subr.mxu0 0.0
    %831 = vmatpush1.msra.mxu0 %v160
    %832 = vmatprep.subr.mxu0 0.0
    %833 = vmatpush1.msra.mxu0 0.0
    %834 = vmatprep.subr.mxu0 0.0
    %835 = vmatpush1.msra.mxu0 0.0
    %836 = vmatprep.subr.mxu0 0.0
    %837 = vmatpush1.msra.mxu0 0.0
    %838 = vmatprep.subr.mxu0 0.0
    %839 = vmatpush1.msra.mxu0 0.0
    %840 = vmatprep.subr.mxu0 0.0
    %841 = vmatpush1.msra.mxu0 0.0
    %842 = vmatprep.subr.mxu0 0.0
    %843 = vmatpush1.msra.mxu0 0.0
    %844 = vmatprep.subr.mxu0 0.0
    %845 = vmatpush1.msra.mxu0 0.0
    %846 = vmatprep.subr.mxu0 0.0
    %847 = vmatpush1.msra.mxu0 0.0
    %848 = vmatprep.subr.mxu0 0.0
    %849 = vmatpush1.msra.mxu0 0.0
    %850 = vmatprep.subr.mxu0 0.0
    %851 = vmatpush1.msra.mxu0 0.0
    %852 = vmatprep.subr.mxu0 0.0
    %853 = vmatpush1.msra.mxu0 0.0
    %854 = vmatprep.subr.mxu0 0.0
    %855 = vmatpush1.msra.mxu0 0.0
    %856 = vmatprep.subr.mxu0 0.0
    %857 = vmatpush1.msra.mxu0 0.0
    %858 = vmatprep.subr.mxu0 0.0
    %859 = vmatpush1.msra.mxu0 0.0
    %860 = vmatprep.subr.mxu0 0.0
    %861 = vmatpush1.msra.mxu0 0.0
    %862 = vmatprep.subr.mxu0 0.0
    %863 = vmatpush1.msra.mxu0 0.0
    %864 = vmatprep.subr.mxu0 0.0
    %865 = vmatpush1.msra.mxu0 0.0
    %866 = vmatprep.subr.mxu0 0.0
    %867 = vmatpush1.msra.mxu0 0.0
    %868 = vmatprep.subr.mxu0 0.0
    %869 = vmatpush1.msra.mxu0 0.0
    %870 = vmatprep.subr.mxu0 0.0
    %871 = vmatpush1.msra.mxu0 0.0
    %872 = vmatprep.subr.mxu0 0.0
    %873 = vmatpush1.msra.mxu0 0.0
    %874 = vmatprep.subr.mxu0 0.0
    %875 = vmatpush1.msra.mxu0 0.0
    %876 = vmatprep.subr.mxu0 0.0
    %877 = vmatpush1.msra.mxu0 0.0
    %878 = vmatprep.subr.mxu0 0.0
    %879 = vmatpush1.msra.mxu0 0.0
    %880 = vmatprep.subr.mxu0 0.0
    %881 = vmatpush1.msra.mxu0 0.0
    %882 = vmatprep.subr.mxu0 0.0
    %883 = vmatpush1.msra.mxu0 0.0
    %884 = vmatprep.subr.mxu0 0.0
    %885 = vmatpush1.msra.mxu0 0.0
    %886 = vmatprep.subr.mxu0 0.0
    %887 = vmatpush1.msra.mxu0 0.0
    %888 = vmatprep.subr.mxu0 0.0
    %889 = vmatpush1.msra.mxu0 0.0
    %890 = vmatprep.subr.mxu0 0.0
    %891 = vmatpush1.msra.mxu0 0.0
    %892 = vmatprep.subr.mxu0 0.0
    %893 = vmatpush1.msra.mxu0 0.0
    %894 = vmatprep.mubr.f32.mxu0 0.0
    %895 = vmatmul.mubr.f32.gmra.mrb[0].mxu0 %v825
    %v896 = vpop.f32.mrb[0].mxu0
    %v897 = vadd.f32 0.0, %v896
    %v898 = vpop.f32.mrb[0].mxu0
    %899 = vmatprep.mubr.f32.mxu0 0.0
    %900 = vmatmul.mubr.f32.gmra.mrb[0].mxu0 %v828
    %v901 = vpop.f32.mrb[0].mxu0
    %v902 = vadd.f32 0.0, %v901
    %v903 = vpop.f32.mrb[0].mxu0
    %904 = vdwg.mxu0
    %v906 = vsel %vm166, %v415, 0
    %v909 = vsel %vm166, %v491, 0
    %911 = vmatprep.subr.mxu0 0.0
    %912 = vmatpush1.msra.mxu0 %v159
    %913 = vmatprep.subr.mxu0 0.0
    %914 = vmatpush1.msra.mxu0 0.0
    %915 = vmatprep.subr.mxu0 0.0
    %916 = vmatpush1.msra.mxu0 0.0
    %917 = vmatprep.subr.mxu0 0.0
    %918 = vmatpush1.msra.mxu0 0.0
    %919 = vmatprep.subr.mxu0 0.0
    %920 = vmatpush1.msra.mxu0 0.0
    %921 = vmatprep.subr.mxu0 0.0
    %922 = vmatpush1.msra.mxu0 0.0
    %923 = vmatprep.subr.mxu0 0.0
    %924 = vmatpush1.msra.mxu0 0.0
    %925 = vmatprep.subr.mxu0 0.0
    %926 = vmatpush1.msra.mxu0 0.0
    %927 = vmatprep.subr.mxu0 0.0
    %928 = vmatpush1.msra.mxu0 0.0
    %929 = vmatprep.subr.mxu0 0.0
    %930 = vmatpush1.msra.mxu0 0.0
    %931 = vmatprep.subr.mxu0 0.0
    %932 = vmatpush1.msra.mxu0 0.0
    %933 = vmatprep.subr.mxu0 0.0
    %934 = vmatpush1.msra.mxu0 0.0
    %935 = vmatprep.subr.mxu0 0.0
    %936 = vmatpush1.msra.mxu0 0.0
    %937 = vmatprep.subr.mxu0 0.0
    %938 = vmatpush1.msra.mxu0 0.0
    %939 = vmatprep.subr.mxu0 0.0
    %940 = vmatpush1.msra.mxu0 0.0
    %941 = vmatprep.subr.mxu0 0.0
    %942 = vmatpush1.msra.mxu0 0.0
    %943 = vmatprep.subr.mxu0 0.0
    %944 = vmatpush1.msra.mxu0 0.0
    %945 = vmatprep.subr.mxu0 0.0
    %946 = vmatpush1.msra.mxu0 0.0
    %947 = vmatprep.subr.mxu0 0.0
    %948 = vmatpush1.msra.mxu0 0.0
    %949 = vmatprep.subr.mxu0 0.0
    %950 = vmatpush1.msra.mxu0 0.0
    %951 = vmatprep.subr.mxu0 0.0
    %952 = vmatpush1.msra.mxu0 0.0
    %953 = vmatprep.subr.mxu0 0.0
    %954 = vmatpush1.msra.mxu0 0.0
    %955 = vmatprep.subr.mxu0 0.0
    %956 = vmatpush1.msra.mxu0 0.0
    %957 = vmatprep.subr.mxu0 0.0
    %958 = vmatpush1.msra.mxu0 0.0
    %959 = vmatprep.subr.mxu0 0.0
    %960 = vmatpush1.msra.mxu0 0.0
    %961 = vmatprep.subr.mxu0 0.0
    %962 = vmatpush1.msra.mxu0 0.0
    %963 = vmatprep.subr.mxu0 0.0
    %964 = vmatpush1.msra.mxu0 0.0
    %965 = vmatprep.subr.mxu0 0.0
    %966 = vmatpush1.msra.mxu0 0.0
    %967 = vmatprep.subr.mxu0 0.0
    %968 = vmatpush1.msra.mxu0 0.0
    %969 = vmatprep.subr.mxu0 0.0
    %970 = vmatpush1.msra.mxu0 0.0
    %971 = vmatprep.subr.mxu0 0.0
    %972 = vmatpush1.msra.mxu0 0.0
    %973 = vmatprep.subr.mxu0 0.0
    %974 = vmatpush1.msra.mxu0 0.0
    %975 = vmatprep.mubr.f32.mxu0 0.0
    %976 = vmatmul.mubr.f32.gmra.mrb[0].mxu0 %v906
    %v977 = vpop.f32.mrb[0].mxu0
    %v978 = vadd.f32 %v897, %v977
    %v979 = vpop.f32.mrb[0].mxu0
    %980 = vmatprep.mubr.f32.mxu0 0.0
    %981 = vmatmul.mubr.f32.gmra.mrb[0].mxu0 %v909
    %v982 = vpop.f32.mrb[0].mxu0
    %v983 = vadd.f32 %v902, %v982
    %v984 = vpop.f32.mrb[0].mxu0
    %985 = vdwg.mxu0
    %986 = vrot.lane.b32.xlu0 %v157, 112
    %v987 = vpop.permute.xlu0 %986
    %988 = vrot.lane.b32.xlu0 %v149, 80
    %v989 = vpop.permute.xlu0 %988
    %v990 = vsel %vm166, %v987, 0
    %v992 = vsel %vm166, %v989, 0
    %994 = vmatprep.subr.mxu0 0.0
    %995 = vmatpush1.xpose.msra.mxu0 %v992
    %996 = vmatprep.subr.mxu0 0.0
    %997 = vmatpush1.xpose.msra.mxu0 0.0
    %998 = vmatprep.subr.mxu0 0.0
    %999 = vmatpush1.xpose.msra.mxu0 0.0
    %1000 = vmatprep.subr.mxu0 0.0
    %1001 = vmatpush1.xpose.msra.mxu0 0.0
    %1002 = vmatprep.subr.mxu0 0.0
    %1003 = vmatpush1.xpose.msra.mxu0 0.0
    %1004 = vmatprep.subr.mxu0 0.0
    %1005 = vmatpush1.xpose.msra.mxu0 0.0
    %1006 = vmatprep.subr.mxu0 0.0
    %1007 = vmatpush1.xpose.msra.mxu0 0.0
    %1008 = vmatprep.subr.mxu0 0.0
    %1009 = vmatpush1.xpose.msra.mxu0 0.0
    %1010 = vmatprep.subr.mxu0 0.0
    %1011 = vmatpush1.xpose.msra.mxu0 0.0
    %1012 = vmatprep.subr.mxu0 0.0
    %1013 = vmatpush1.xpose.msra.mxu0 0.0
    %1014 = vmatprep.subr.mxu0 0.0
    %1015 = vmatpush1.xpose.msra.mxu0 0.0
    %1016 = vmatprep.subr.mxu0 0.0
    %1017 = vmatpush1.xpose.msra.mxu0 0.0
    %1018 = vmatprep.subr.mxu0 0.0
    %1019 = vmatpush1.xpose.msra.mxu0 0.0
    %1020 = vmatprep.subr.mxu0 0.0
    %1021 = vmatpush1.xpose.msra.mxu0 0.0
    %1022 = vmatprep.subr.mxu0 0.0
    %1023 = vmatpush1.xpose.msra.mxu0 0.0
    %1024 = vmatprep.subr.mxu0 0.0
    %1025 = vmatpush1.xpose.msra.mxu0 0.0
    %1026 = vmatprep.subr.mxu0 0.0
    %1027 = vmatpush1.xpose.msra.mxu0 0.0
    %1028 = vmatprep.subr.mxu0 0.0
    %1029 = vmatpush1.xpose.msra.mxu0 0.0
    %1030 = vmatprep.subr.mxu0 0.0
    %1031 = vmatpush1.xpose.msra.mxu0 0.0
    %1032 = vmatprep.subr.mxu0 0.0
    %1033 = vmatpush1.xpose.msra.mxu0 0.0
    %1034 = vmatprep.subr.mxu0 0.0
    %1035 = vmatpush1.xpose.msra.mxu0 0.0
    %1036 = vmatprep.subr.mxu0 0.0
    %1037 = vmatpush1.xpose.msra.mxu0 0.0
    %1038 = vmatprep.subr.mxu0 0.0
    %1039 = vmatpush1.xpose.msra.mxu0 0.0
    %1040 = vmatprep.subr.mxu0 0.0
    %1041 = vmatpush1.xpose.msra.mxu0 0.0
    %1042 = vmatprep.subr.mxu0 0.0
    %1043 = vmatpush1.xpose.msra.mxu0 0.0
    %1044 = vmatprep.subr.mxu0 0.0
    %1045 = vmatpush1.xpose.msra.mxu0 0.0
    %1046 = vmatprep.subr.mxu0 0.0
    %1047 = vmatpush1.xpose.msra.mxu0 0.0
    %1048 = vmatprep.subr.mxu0 0.0
    %1049 = vmatpush1.xpose.msra.mxu0 0.0
    %1050 = vmatprep.subr.mxu0 0.0
    %1051 = vmatpush1.xpose.msra.mxu0 0.0
    %1052 = vmatprep.subr.mxu0 0.0
    %1053 = vmatpush1.xpose.msra.mxu0 0.0
    %1054 = vmatprep.subr.mxu0 0.0
    %1055 = vmatpush1.xpose.msra.mxu0 0.0
    %1056 = vmatprep.subr.mxu0 0.0
    %1057 = vmatpush1.xpose.msra.mxu0 0.0
    %1058 = vmatprep.mubr.f32.mxu0 0.0
    %1059 = vmatmul.mubr.f32.gmra.mrb[0].mxu0 %v990
    %v1060 = vpop.f32.mrb[0].mxu0
    %v1061 = vadd.f32 0.0, %v1060
    %v1062 = vpop.f32.mrb[0].mxu0
    %1063 = vdwg.mxu0
    %1064 = vrot.lane.b32.xlu0 %v158, 112
    %v1065 = vpop.permute.xlu0 %1064
    %1066 = vrot.lane.b32.xlu0 %v154, 80
    %v1067 = vpop.permute.xlu0 %1066
    %v1068 = vsel %vm166, %v1065, 0
    %v1070 = vsel %vm166, %v1067, 0
    %1072 = vmatprep.subr.mxu0 0.0
    %1073 = vmatpush1.xpose.msra.mxu0 %v1070
    %1074 = vmatprep.subr.mxu0 0.0
    %1075 = vmatpush1.xpose.msra.mxu0 0.0
    %1076 = vmatprep.subr.mxu0 0.0
    %1077 = vmatpush1.xpose.msra.mxu0 0.0
    %1078 = vmatprep.subr.mxu0 0.0
    %1079 = vmatpush1.xpose.msra.mxu0 0.0
    %1080 = vmatprep.subr.mxu0 0.0
    %1081 = vmatpush1.xpose.msra.mxu0 0.0
    %1082 = vmatprep.subr.mxu0 0.0
    %1083 = vmatpush1.xpose.msra.mxu0 0.0
    %1084 = vmatprep.subr.mxu0 0.0
    %1085 = vmatpush1.xpose.msra.mxu0 0.0
    %1086 = vmatprep.subr.mxu0 0.0
    %1087 = vmatpush1.xpose.msra.mxu0 0.0
    %1088 = vmatprep.subr.mxu0 0.0
    %1089 = vmatpush1.xpose.msra.mxu0 0.0
    %1090 = vmatprep.subr.mxu0 0.0
    %1091 = vmatpush1.xpose.msra.mxu0 0.0
    %1092 = vmatprep.subr.mxu0 0.0
    %1093 = vmatpush1.xpose.msra.mxu0 0.0
    %1094 = vmatprep.subr.mxu0 0.0
    %1095 = vmatpush1.xpose.msra.mxu0 0.0
    %1096 = vmatprep.subr.mxu0 0.0
    %1097 = vmatpush1.xpose.msra.mxu0 0.0
    %1098 = vmatprep.subr.mxu0 0.0
    %1099 = vmatpush1.xpose.msra.mxu0 0.0
    %1100 = vmatprep.subr.mxu0 0.0
    %1101 = vmatpush1.xpose.msra.mxu0 0.0
    %1102 = vmatprep.subr.mxu0 0.0
    %1103 = vmatpush1.xpose.msra.mxu0 0.0
    %1104 = vmatprep.subr.mxu0 0.0
    %1105 = vmatpush1.xpose.msra.mxu0 0.0
    %1106 = vmatprep.subr.mxu0 0.0
    %1107 = vmatpush1.xpose.msra.mxu0 0.0
    %1108 = vmatprep.subr.mxu0 0.0
    %1109 = vmatpush1.xpose.msra.mxu0 0.0
    %1110 = vmatprep.subr.mxu0 0.0
    %1111 = vmatpush1.xpose.msra.mxu0 0.0
    %1112 = vmatprep.subr.mxu0 0.0
    %1113 = vmatpush1.xpose.msra.mxu0 0.0
    %1114 = vmatprep.subr.mxu0 0.0
    %1115 = vmatpush1.xpose.msra.mxu0 0.0
    %1116 = vmatprep.subr.mxu0 0.0
    %1117 = vmatpush1.xpose.msra.mxu0 0.0
    %1118 = vmatprep.subr.mxu0 0.0
    %1119 = vmatpush1.xpose.msra.mxu0 0.0
    %1120 = vmatprep.subr.mxu0 0.0
    %1121 = vmatpush1.xpose.msra.mxu0 0.0
    %1122 = vmatprep.subr.mxu0 0.0
    %1123 = vmatpush1.xpose.msra.mxu0 0.0
    %1124 = vmatprep.subr.mxu0 0.0
    %1125 = vmatpush1.xpose.msra.mxu0 0.0
    %1126 = vmatprep.subr.mxu0 0.0
    %1127 = vmatpush1.xpose.msra.mxu0 0.0
    %1128 = vmatprep.subr.mxu0 0.0
    %1129 = vmatpush1.xpose.msra.mxu0 0.0
    %1130 = vmatprep.subr.mxu0 0.0
    %1131 = vmatpush1.xpose.msra.mxu0 0.0
    %1132 = vmatprep.subr.mxu0 0.0
    %1133 = vmatpush1.xpose.msra.mxu0 0.0
    %1134 = vmatprep.subr.mxu0 0.0
    %1135 = vmatpush1.xpose.msra.mxu0 0.0
    %1136 = vmatprep.mubr.f32.mxu0 0.0
    %1137 = vmatmul.mubr.f32.gmra.mrb[0].mxu0 %v1068
    %v1138 = vpop.f32.mrb[0].mxu0
    %v1139 = vadd.f32 0.0, %v1138
    %v1140 = vpop.f32.mrb[0].mxu0
    %1141 = vdwg.mxu0
    %v1142 = vsel %vm166, %v1061, -inf
    %1143 = vmax.xlane.f32.xlu0 %v1142
    %v1144 = vpop.xlane.xlu0 %1143
    %v1145 = vsel %vm166, %v1139, -inf
    %1146 = vmax.xlane.f32.xlu0 %v1145
    %v1147 = vpop.xlane.xlu0 %1146
    %v1148 = vsub.f32 %v1061, %v1144
    %v1149 = vsub.f32 %v1139, %v1147
    %v1150 = vmul.f32 %v1148, 1.442695
    %v1151 = vpow.pop %v1150
    %v1152 = vmul.f32 %v1149, 1.442695
    %v1153 = vpow.pop %v1152
    %v1154 = vsel %vm166, %v1151, 0.0
    %1155 = vadd.xlane.f32.xlu0 %v1154
    %v1156 = vpop.xlane.xlu0 %1155
    %v1157 = vsel %vm166, %v1153, 0.0
    %1158 = vadd.xlane.f32.xlu0 %v1157
    %v1159 = vpop.xlane.xlu0 %1158
    %v1160 = vrcp.pop %v1156
    %v1161 = vrcp.pop %v1159
    %v1162 = vmul.f32 %v1151, %v1160
    %v1163 = vmul.f32 %v1153, %v1161
    %1164 = vrot.lane.b32.xlu0 %v149, 48
    %v1165 = vpop.permute.xlu0 %1164
    %v1168 = vsel %vm166, %v1162, 0
    %1170 = vmatprep.subr.mxu0 0.0
    %1171 = vmatpush1.msra.mxu0 %v1165
    %1172 = vmatprep.subr.mxu0 0.0
    %1173 = vmatpush1.msra.mxu0 0.0
    %1174 = vmatprep.subr.mxu0 0.0
    %1175 = vmatpush1.msra.mxu0 0.0
    %1176 = vmatprep.subr.mxu0 0.0
    %1177 = vmatpush1.msra.mxu0 0.0
    %1178 = vmatprep.subr.mxu0 0.0
    %1179 = vmatpush1.msra.mxu0 0.0
    %1180 = vmatprep.subr.mxu0 0.0
    %1181 = vmatpush1.msra.mxu0 0.0
    %1182 = vmatprep.subr.mxu0 0.0
    %1183 = vmatpush1.msra.mxu0 0.0
    %1184 = vmatprep.subr.mxu0 0.0
    %1185 = vmatpush1.msra.mxu0 0.0
    %1186 = vmatprep.subr.mxu0 0.0
    %1187 = vmatpush1.msra.mxu0 0.0
    %1188 = vmatprep.subr.mxu0 0.0
    %1189 = vmatpush1.msra.mxu0 0.0
    %1190 = vmatprep.subr.mxu0 0.0
    %1191 = vmatpush1.msra.mxu0 0.0
    %1192 = vmatprep.subr.mxu0 0.0
    %1193 = vmatpush1.msra.mxu0 0.0
    %1194 = vmatprep.subr.mxu0 0.0
    %1195 = vmatpush1.msra.mxu0 0.0
    %1196 = vmatprep.subr.mxu0 0.0
    %1197 = vmatpush1.msra.mxu0 0.0
    %1198 = vmatprep.subr.mxu0 0.0
    %1199 = vmatpush1.msra.mxu0 0.0
    %1200 = vmatprep.subr.mxu0 0.0
    %1201 = vmatpush1.msra.mxu0 0.0
    %1202 = vmatprep.subr.mxu0 0.0
    %1203 = vmatpush1.msra.mxu0 0.0
    %1204 = vmatprep.subr.mxu0 0.0
    %1205 = vmatpush1.msra.mxu0 0.0
    %1206 = vmatprep.subr.mxu0 0.0
    %1207 = vmatpush1.msra.mxu0 0.0
    %1208 = vmatprep.subr.mxu0 0.0
    %1209 = vmatpush1.msra.mxu0 0.0
    %1210 = vmatprep.subr.mxu0 0.0
    %1211 = vmatpush1.msra.mxu0 0.0
    %1212 = vmatprep.subr.mxu0 0.0
    %1213 = vmatpush1.msra.mxu0 0.0
    %1214 = vmatprep.subr.mxu0 0.0
    %1215 = vmatpush1.msra.mxu0 0.0
    %1216 = vmatprep.subr.mxu0 0.0
    %1217 = vmatpush1.msra.mxu0 0.0
    %1218 = vmatprep.subr.mxu0 0.0
    %1219 = vmatpush1.msra.mxu0 0.0
    %1220 = vmatprep.subr.mxu0 0.0
    %1221 = vmatpush1.msra.mxu0 0.0
    %1222 = vmatprep.subr.mxu0 0.0
    %1223 = vmatpush1.msra.mxu0 0.0
    %1224 = vmatprep.subr.mxu0 0.0
    %1225 = vmatpush1.msra.mxu0 0.0
    %1226 = vmatprep.subr.mxu0 0.0
    %1227 = vmatpush1.msra.mxu0 0.0
    %1228 = vmatprep.subr.mxu0 0.0
    %1229 = vmatpush1.msra.mxu0 0.0
    %1230 = vmatprep.subr.mxu0 0.0
    %1231 = vmatpush1.msra.mxu0 0.0
    %1232 = vmatprep.subr.mxu0 0.0
    %1233 = vmatpush1.msra.mxu0 0.0
    %1234 = vmatprep.mubr.f32.mxu0 0.0
    %1235 = vmatmul.mubr.f32.gmra.mrb[0].mxu0 %v1168
    %v1236 = vpop.f32.mrb[0].mxu0
    %v1237 = vadd.f32 0.0, %v1236
    %v1238 = vpop.f32.mrb[0].mxu0
    %1239 = vdwg.mxu0
    %1240 = vrot.lane.b32.xlu0 %v154, 48
    %v1241 = vpop.permute.xlu0 %1240
    %v1244 = vsel %vm166, %v1163, 0
    %1246 = vmatprep.subr.mxu0 0.0
    %1247 = vmatpush1.msra.mxu0 %v1241
    %1248 = vmatprep.subr.mxu0 0.0
    %1249 = vmatpush1.msra.mxu0 0.0
    %1250 = vmatprep.subr.mxu0 0.0
    %1251 = vmatpush1.msra.mxu0 0.0
    %1252 = vmatprep.subr.mxu0 0.0
    %1253 = vmatpush1.msra.mxu0 0.0
    %1254 = vmatprep.subr.mxu0 0.0
    %1255 = vmatpush1.msra.mxu0 0.0
    %1256 = vmatprep.subr.mxu0 0.0
    %1257 = vmatpush1.msra.mxu0 0.0
    %1258 = vmatprep.subr.mxu0 0.0
    %1259 = vmatpush1.msra.mxu0 0.0
    %1260 = vmatprep.subr.mxu0 0.0
    %1261 = vmatpush1.msra.mxu0 0.0
    %1262 = vmatprep.subr.mxu0 0.0
    %1263 = vmatpush1.msra.mxu0 0.0
    %1264 = vmatprep.subr.mxu0 0.0
    %1265 = vmatpush1.msra.mxu0 0.0
    %1266 = vmatprep.subr.mxu0 0.0
    %1267 = vmatpush1.msra.mxu0 0.0
    %1268 = vmatprep.subr.mxu0 0.0
    %1269 = vmatpush1.msra.mxu0 0.0
    %1270 = vmatprep.subr.mxu0 0.0
    %1271 = vmatpush1.msra.mxu0 0.0
    %1272 = vmatprep.subr.mxu0 0.0
    %1273 = vmatpush1.msra.mxu0 0.0
    %1274 = vmatprep.subr.mxu0 0.0
    %1275 = vmatpush1.msra.mxu0 0.0
    %1276 = vmatprep.subr.mxu0 0.0
    %1277 = vmatpush1.msra.mxu0 0.0
    %1278 = vmatprep.subr.mxu0 0.0
    %1279 = vmatpush1.msra.mxu0 0.0
    %1280 = vmatprep.subr.mxu0 0.0
    %1281 = vmatpush1.msra.mxu0 0.0
    %1282 = vmatprep.subr.mxu0 0.0
    %1283 = vmatpush1.msra.mxu0 0.0
    %1284 = vmatprep.subr.mxu0 0.0
    %1285 = vmatpush1.msra.mxu0 0.0
    %1286 = vmatprep.subr.mxu0 0.0
    %1287 = vmatpush1.msra.mxu0 0.0
    %1288 = vmatprep.subr.mxu0 0.0
    %1289 = vmatpush1.msra.mxu0 0.0
    %1290 = vmatprep.subr.mxu0 0.0
    %1291 = vmatpush1.msra.mxu0 0.0
    %1292 = vmatprep.subr.mxu0 0.0
    %1293 = vmatpush1.msra.mxu0 0.0
    %1294 = vmatprep.subr.mxu0 0.0
    %1295 = vmatpush1.msra.mxu0 0.0
    %1296 = vmatprep.subr.mxu0 0.0
    %1297 = vmatpush1.msra.mxu0 0.0
    %1298 = vmatprep.subr.mxu0 0.0
    %1299 = vmatpush1.msra.mxu0 0.0
    %1300 = vmatprep.subr.mxu0 0.0
    %1301 = vmatpush1.msra.mxu0 0.0
    %1302 = vmatprep.subr.mxu0 0.0
    %1303 = vmatpush1.msra.mxu0 0.0
    %1304 = vmatprep.subr.mxu0 0.0
    %1305 = vmatpush1.msra.mxu0 0.0
    %1306 = vmatprep.subr.mxu0 0.0
    %1307 = vmatpush1.msra.mxu0 0.0
    %1308 = vmatprep.subr.mxu0 0.0
    %1309 = vmatpush1.msra.mxu0 0.0
    %1310 = vmatprep.mubr.f32.mxu0 0.0
    %1311 = vmatmul.mubr.f32.gmra.mrb[0].mxu0 %v1244
    %v1312 = vpop.f32.mrb[0].mxu0
    %v1313 = vadd.f32 0.0, %v1312
    %v1314 = vpop.f32.mrb[0].mxu0
    %1315 = vdwg.mxu0
    %v1317 = vsel %vm166, %v1237, 0
    %v1320 = vsel %vm166, %v1313, 0
    %1322 = vmatprep.subr.mxu0 0.0
    %1323 = vmatpush1.msra.mxu0 %v161
    %1324 = vmatprep.subr.mxu0 0.0
    %1325 = vmatpush1.msra.mxu0 0.0
    %1326 = vmatprep.subr.mxu0 0.0
    %1327 = vmatpush1.msra.mxu0 0.0
    %1328 = vmatprep.subr.mxu0 0.0
    %1329 = vmatpush1.msra.mxu0 0.0
    %1330 = vmatprep.subr.mxu0 0.0
    %1331 = vmatpush1.msra.mxu0 0.0
    %1332 = vmatprep.subr.mxu0 0.0
    %1333 = vmatpush1.msra.mxu0 0.0
    %1334 = vmatprep.subr.mxu0 0.0
    %1335 = vmatpush1.msra.mxu0 0.0
    %1336 = vmatprep.subr.mxu0 0.0
    %1337 = vmatpush1.msra.mxu0 0.0
    %1338 = vmatprep.subr.mxu0 0.0
    %1339 = vmatpush1.msra.mxu0 0.0
    %1340 = vmatprep.subr.mxu0 0.0
    %1341 = vmatpush1.msra.mxu0 0.0
    %1342 = vmatprep.subr.mxu0 0.0
    %1343 = vmatpush1.msra.mxu0 0.0
    %1344 = vmatprep.subr.mxu0 0.0
    %1345 = vmatpush1.msra.mxu0 0.0
    %1346 = vmatprep.subr.mxu0 0.0
    %1347 = vmatpush1.msra.mxu0 0.0
    %1348 = vmatprep.subr.mxu0 0.0
    %1349 = vmatpush1.msra.mxu0 0.0
    %1350 = vmatprep.subr.mxu0 0.0
    %1351 = vmatpush1.msra.mxu0 0.0
    %1352 = vmatprep.subr.mxu0 0.0
    %1353 = vmatpush1.msra.mxu0 0.0
    %1354 = vmatprep.subr.mxu0 0.0
    %1355 = vmatpush1.msra.mxu0 0.0
    %1356 = vmatprep.subr.mxu0 0.0
    %1357 = vmatpush1.msra.mxu0 0.0
    %1358 = vmatprep.subr.mxu0 0.0
    %1359 = vmatpush1.msra.mxu0 0.0
    %1360 = vmatprep.subr.mxu0 0.0
    %1361 = vmatpush1.msra.mxu0 0.0
    %1362 = vmatprep.subr.mxu0 0.0
    %1363 = vmatpush1.msra.mxu0 0.0
    %1364 = vmatprep.subr.mxu0 0.0
    %1365 = vmatpush1.msra.mxu0 0.0
    %1366 = vmatprep.subr.mxu0 0.0
    %1367 = vmatpush1.msra.mxu0 0.0
    %1368 = vmatprep.subr.mxu0 0.0
    %1369 = vmatpush1.msra.mxu0 0.0
    %1370 = vmatprep.subr.mxu0 0.0
    %1371 = vmatpush1.msra.mxu0 0.0
    %1372 = vmatprep.subr.mxu0 0.0
    %1373 = vmatpush1.msra.mxu0 0.0
    %1374 = vmatprep.subr.mxu0 0.0
    %1375 = vmatpush1.msra.mxu0 0.0
    %1376 = vmatprep.subr.mxu0 0.0
    %1377 = vmatpush1.msra.mxu0 0.0
    %1378 = vmatprep.subr.mxu0 0.0
    %1379 = vmatpush1.msra.mxu0 0.0
    %1380 = vmatprep.subr.mxu0 0.0
    %1381 = vmatpush1.msra.mxu0 0.0
    %1382 = vmatprep.subr.mxu0 0.0
    %1383 = vmatpush1.msra.mxu0 0.0
    %1384 = vmatprep.subr.mxu0 0.0
    %1385 = vmatpush1.msra.mxu0 0.0
    %1386 = vmatprep.mubr.f32.mxu0 0.0
    %1387 = vmatmul.mubr.f32.gmra.mrb[0].mxu0 %v1317
    %v1388 = vpop.f32.mrb[0].mxu0
    %v1389 = vadd.f32 0.0, %v1388
    %v1390 = vpop.f32.mrb[0].mxu0
    %1391 = vmatprep.mubr.f32.mxu0 0.0
    %1392 = vmatmul.mubr.f32.gmra.mrb[0].mxu0 %v1320
    %v1393 = vpop.f32.mrb[0].mxu0
    %v1394 = vadd.f32 0.0, %v1393
    %v1395 = vpop.f32.mrb[0].mxu0
    %1396 = vdwg.mxu0
    %v1397 = vadd.f32 %v978, %v1389
    %v1398 = vadd.f32 %v983, %v1394
    %1399 = vrot.lane.b32.xlu0 %v157, 104
    %v1400 = vpop.permute.xlu0 %1399
    %1401 = vrot.lane.b32.xlu0 %v149, 72
    %v1402 = vpop.permute.xlu0 %1401
    %v1403 = vsel %vm166, %v1400, 0
    %v1405 = vsel %vm166, %v1402, 0
    %1407 = vmatprep.subr.mxu0 0.0
    %1408 = vmatpush1.xpose.msra.mxu0 %v1405
    %1409 = vmatprep.subr.mxu0 0.0
    %1410 = vmatpush1.xpose.msra.mxu0 0.0
    %1411 = vmatprep.subr.mxu0 0.0
    %1412 = vmatpush1.xpose.msra.mxu0 0.0
    %1413 = vmatprep.subr.mxu0 0.0
    %1414 = vmatpush1.xpose.msra.mxu0 0.0
    %1415 = vmatprep.subr.mxu0 0.0
    %1416 = vmatpush1.xpose.msra.mxu0 0.0
    %1417 = vmatprep.subr.mxu0 0.0
    %1418 = vmatpush1.xpose.msra.mxu0 0.0
    %1419 = vmatprep.subr.mxu0 0.0
    %1420 = vmatpush1.xpose.msra.mxu0 0.0
    %1421 = vmatprep.subr.mxu0 0.0
    %1422 = vmatpush1.xpose.msra.mxu0 0.0
    %1423 = vmatprep.subr.mxu0 0.0
    %1424 = vmatpush1.xpose.msra.mxu0 0.0
    %1425 = vmatprep.subr.mxu0 0.0
    %1426 = vmatpush1.xpose.msra.mxu0 0.0
    %1427 = vmatprep.subr.mxu0 0.0
    %1428 = vmatpush1.xpose.msra.mxu0 0.0
    %1429 = vmatprep.subr.mxu0 0.0
    %1430 = vmatpush1.xpose.msra.mxu0 0.0
    %1431 = vmatprep.subr.mxu0 0.0
    %1432 = vmatpush1.xpose.msra.mxu0 0.0
    %1433 = vmatprep.subr.mxu0 0.0
    %1434 = vmatpush1.xpose.msra.mxu0 0.0
    %1435 = vmatprep.subr.mxu0 0.0
    %1436 = vmatpush1.xpose.msra.mxu0 0.0
    %1437 = vmatprep.subr.mxu0 0.0
    %1438 = vmatpush1.xpose.msra.mxu0 0.0
    %1439 = vmatprep.subr.mxu0 0.0
    %1440 = vmatpush1.xpose.msra.mxu0 0.0
    %1441 = vmatprep.subr.mxu0 0.0
    %1442 = vmatpush1.xpose.msra.mxu0 0.0
    %1443 = vmatprep.subr.mxu0 0.0
    %1444 = vmatpush1.xpose.msra.mxu0 0.0
    %1445 = vmatprep.subr.mxu0 0.0
    %1446 = vmatpush1.xpose.msra.mxu0 0.0
    %1447 = vmatprep.subr.mxu0 0.0
    %1448 = vmatpush1.xpose.msra.mxu0 0.0
    %1449 = vmatprep.subr.mxu0 0.0
    %1450 = vmatpush1.xpose.msra.mxu0 0.0
    %1451 = vmatprep.subr.mxu0 0.0
    %1452 = vmatpush1.xpose.msra.mxu0 0.0
    %1453 = vmatprep.subr.mxu0 0.0
    %1454 = vmatpush1.xpose.msra.mxu0 0.0
    %1455 = vmatprep.subr.mxu0 0.0
    %1456 = vmatpush1.xpose.msra.mxu0 0.0
    %1457 = vmatprep.subr.mxu0 0.0
    %1458 = vmatpush1.xpose.msra.mxu0 0.0
    %1459 = vmatprep.subr.mxu0 0.0
    %1460 = vmatpush1.xpose.msra.mxu0 0.0
    %1461 = vmatprep.subr.mxu0 0.0
    %1462 = vmatpush1.xpose.msra.mxu0 0.0
    %1463 = vmatprep.subr.mxu0 0.0
    %1464 = vmatpush1.xpose.msra.mxu0 0.0
    %1465 = vmatprep.subr.mxu0 0.0
    %1466 = vmatpush1.xpose.msra.mxu0 0.0
    %1467 = vmatprep.subr.mxu0 0.0
    %1468 = vmatpush1.xpose.msra.mxu0 0.0
    %1469 = vmatprep.subr.mxu0 0.0
    %1470 = vmatpush1.xpose.msra.mxu0 0.0
    %1471 = vmatprep.mubr.f32.mxu0 0.0
    %1472 = vmatmul.mubr.f32.gmra.mrb[0].mxu0 %v1403
    %v1473 = vpop.f32.mrb[0].mxu0
    %v1474 = vadd.f32 0.0, %v1473
    %v1475 = vpop.f32.mrb[0].mxu0
    %1476 = vdwg.mxu0
    %1477 = vrot.lane.b32.xlu0 %v158, 104
    %v1478 = vpop.permute.xlu0 %1477
    %1479 = vrot.lane.b32.xlu0 %v154, 72
    %v1480 = vpop.permute.xlu0 %1479
    %v1481 = vsel %vm166, %v1478, 0
    %v1483 = vsel %vm166, %v1480, 0
    %1485 = vmatprep.subr.mxu0 0.0
    %1486 = vmatpush1.xpose.msra.mxu0 %v1483
    %1487 = vmatprep.subr.mxu0 0.0
    %1488 = vmatpush1.xpose.msra.mxu0 0.0
    %1489 = vmatprep.subr.mxu0 0.0
    %1490 = vmatpush1.xpose.msra.mxu0 0.0
    %1491 = vmatprep.subr.mxu0 0.0
    %1492 = vmatpush1.xpose.msra.mxu0 0.0
    %1493 = vmatprep.subr.mxu0 0.0
    %1494 = vmatpush1.xpose.msra.mxu0 0.0
    %1495 = vmatprep.subr.mxu0 0.0
    %1496 = vmatpush1.xpose.msra.mxu0 0.0
    %1497 = vmatprep.subr.mxu0 0.0
    %1498 = vmatpush1.xpose.msra.mxu0 0.0
    %1499 = vmatprep.subr.mxu0 0.0
    %1500 = vmatpush1.xpose.msra.mxu0 0.0
    %1501 = vmatprep.subr.mxu0 0.0
    %1502 = vmatpush1.xpose.msra.mxu0 0.0
    %1503 = vmatprep.subr.mxu0 0.0
    %1504 = vmatpush1.xpose.msra.mxu0 0.0
    %1505 = vmatprep.subr.mxu0 0.0
    %1506 = vmatpush1.xpose.msra.mxu0 0.0
    %1507 = vmatprep.subr.mxu0 0.0
    %1508 = vmatpush1.xpose.msra.mxu0 0.0
    %1509 = vmatprep.subr.mxu0 0.0
    %1510 = vmatpush1.xpose.msra.mxu0 0.0
    %1511 = vmatprep.subr.mxu0 0.0
    %1512 = vmatpush1.xpose.msra.mxu0 0.0
    %1513 = vmatprep.subr.mxu0 0.0
    %1514 = vmatpush1.xpose.msra.mxu0 0.0
    %1515 = vmatprep.subr.mxu0 0.0
    %1516 = vmatpush1.xpose.msra.mxu0 0.0
    %1517 = vmatprep.subr.mxu0 0.0
    %1518 = vmatpush1.xpose.msra.mxu0 0.0
    %1519 = vmatprep.subr.mxu0 0.0
    %1520 = vmatpush1.xpose.msra.mxu0 0.0
    %1521 = vmatprep.subr.mxu0 0.0
    %1522 = vmatpush1.xpose.msra.mxu0 0.0
    %1523 = vmatprep.subr.mxu0 0.0
    %1524 = vmatpush1.xpose.msra.mxu0 0.0
    %1525 = vmatprep.subr.mxu0 0.0
    %1526 = vmatpush1.xpose.msra.mxu0 0.0
    %1527 = vmatprep.subr.mxu0 0.0
    %1528 = vmatpush1.xpose.msra.mxu0 0.0
    %1529 = vmatprep.subr.mxu0 0.0
    %1530 = vmatpush1.xpose.msra.mxu0 0.0
    %1531 = vmatprep.subr.mxu0 0.0
    %1532 = vmatpush1.xpose.msra.mxu0 0.0
    %1533 = vmatprep.subr.mxu0 0.0
    %1534 = vmatpush1.xpose.msra.mxu0 0.0
    %1535 = vmatprep.subr.mxu0 0.0
    %1536 = vmatpush1.xpose.msra.mxu0 0.0
    %1537 = vmatprep.subr.mxu0 0.0
    %1538 = vmatpush1.xpose.msra.mxu0 0.0
    %1539 = vmatprep.subr.mxu0 0.0
    %1540 = vmatpush1.xpose.msra.mxu0 0.0
    %1541 = vmatprep.subr.mxu0 0.0
    %1542 = vmatpush1.xpose.msra.mxu0 0.0
    %1543 = vmatprep.subr.mxu0 0.0
    %1544 = vmatpush1.xpose.msra.mxu0 0.0
    %1545 = vmatprep.subr.mxu0 0.0
    %1546 = vmatpush1.xpose.msra.mxu0 0.0
    %1547 = vmatprep.subr.mxu0 0.0
    %1548 = vmatpush1.xpose.msra.mxu0 0.0
    %1549 = vmatprep.mubr.f32.mxu0 0.0
    %1550 = vmatmul.mubr.f32.gmra.mrb[0].mxu0 %v1481
    %v1551 = vpop.f32.mrb[0].mxu0
    %v1552 = vadd.f32 0.0, %v1551
    %v1553 = vpop.f32.mrb[0].mxu0
    %1554 = vdwg.mxu0
    %v1555 = vsel %vm166, %v1474, -inf
    %1556 = vmax.xlane.f32.xlu0 %v1555
    %v1557 = vpop.xlane.xlu0 %1556
    %v1558 = vsel %vm166, %v1552, -inf
    %1559 = vmax.xlane.f32.xlu0 %v1558
    %v1560 = vpop.xlane.xlu0 %1559
    %v1561 = vsub.f32 %v1474, %v1557
    %v1562 = vsub.f32 %v1552, %v1560
    %v1563 = vmul.f32 %v1561, 1.442695
    %v1564 = vpow.pop %v1563
    %v1565 = vmul.f32 %v1562, 1.442695
    %v1566 = vpow.pop %v1565
    %v1567 = vsel %vm166, %v1564, 0.0
    %1568 = vadd.xlane.f32.xlu0 %v1567
    %v1569 = vpop.xlane.xlu0 %1568
    %v1570 = vsel %vm166, %v1566, 0.0
    %1571 = vadd.xlane.f32.xlu0 %v1570
    %v1572 = vpop.xlane.xlu0 %1571
    %v1573 = vrcp.pop %v1569
    %v1574 = vrcp.pop %v1572
    %v1575 = vmul.f32 %v1564, %v1573
    %v1576 = vmul.f32 %v1566, %v1574
    %1577 = vrot.lane.b32.xlu0 %v149, 40
    %v1578 = vpop.permute.xlu0 %1577
    %v1581 = vsel %vm166, %v1575, 0
    %1583 = vmatprep.subr.mxu0 0.0
    %1584 = vmatpush1.msra.mxu0 %v1578
    %1585 = vmatprep.subr.mxu0 0.0
    %1586 = vmatpush1.msra.mxu0 0.0
    %1587 = vmatprep.subr.mxu0 0.0
    %1588 = vmatpush1.msra.mxu0 0.0
    %1589 = vmatprep.subr.mxu0 0.0
    %1590 = vmatpush1.msra.mxu0 0.0
    %1591 = vmatprep.subr.mxu0 0.0
    %1592 = vmatpush1.msra.mxu0 0.0
    %1593 = vmatprep.subr.mxu0 0.0
    %1594 = vmatpush1.msra.mxu0 0.0
    %1595 = vmatprep.subr.mxu0 0.0
    %1596 = vmatpush1.msra.mxu0 0.0
    %1597 = vmatprep.subr.mxu0 0.0
    %1598 = vmatpush1.msra.mxu0 0.0
    %1599 = vmatprep.subr.mxu0 0.0
    %1600 = vmatpush1.msra.mxu0 0.0
    %1601 = vmatprep.subr.mxu0 0.0
    %1602 = vmatpush1.msra.mxu0 0.0
    %1603 = vmatprep.subr.mxu0 0.0
    %1604 = vmatpush1.msra.mxu0 0.0
    %1605 = vmatprep.subr.mxu0 0.0
    %1606 = vmatpush1.msra.mxu0 0.0
    %1607 = vmatprep.subr.mxu0 0.0
    %1608 = vmatpush1.msra.mxu0 0.0
    %1609 = vmatprep.subr.mxu0 0.0
    %1610 = vmatpush1.msra.mxu0 0.0
    %1611 = vmatprep.subr.mxu0 0.0
    %1612 = vmatpush1.msra.mxu0 0.0
    %1613 = vmatprep.subr.mxu0 0.0
    %1614 = vmatpush1.msra.mxu0 0.0
    %1615 = vmatprep.subr.mxu0 0.0
    %1616 = vmatpush1.msra.mxu0 0.0
    %1617 = vmatprep.subr.mxu0 0.0
    %1618 = vmatpush1.msra.mxu0 0.0
    %1619 = vmatprep.subr.mxu0 0.0
    %1620 = vmatpush1.msra.mxu0 0.0
    %1621 = vmatprep.subr.mxu0 0.0
    %1622 = vmatpush1.msra.mxu0 0.0
    %1623 = vmatprep.subr.mxu0 0.0
    %1624 = vmatpush1.msra.mxu0 0.0
    %1625 = vmatprep.subr.mxu0 0.0
    %1626 = vmatpush1.msra.mxu0 0.0
    %1627 = vmatprep.subr.mxu0 0.0
    %1628 = vmatpush1.msra.mxu0 0.0
    %1629 = vmatprep.subr.mxu0 0.0
    %1630 = vmatpush1.msra.mxu0 0.0
    %1631 = vmatprep.subr.mxu0 0.0
    %1632 = vmatpush1.msra.mxu0 0.0
    %1633 = vmatprep.subr.mxu0 0.0
    %1634 = vmatpush1.msra.mxu0 0.0
    %1635 = vmatprep.subr.mxu0 0.0
    %1636 = vmatpush1.msra.mxu0 0.0
    %1637 = vmatprep.subr.mxu0 0.0
    %1638 = vmatpush1.msra.mxu0 0.0
    %1639 = vmatprep.subr.mxu0 0.0
    %1640 = vmatpush1.msra.mxu0 0.0
    %1641 = vmatprep.subr.mxu0 0.0
    %1642 = vmatpush1.msra.mxu0 0.0
    %1643 = vmatprep.subr.mxu0 0.0
    %1644 = vmatpush1.msra.mxu0 0.0
    %1645 = vmatprep.subr.mxu0 0.0
    %1646 = vmatpush1.msra.mxu0 0.0
    %1647 = vmatprep.mubr.f32.mxu0 0.0
    %1648 = vmatmul.mubr.f32.gmra.mrb[0].mxu0 %v1581
    %v1649 = vpop.f32.mrb[0].mxu0
    %v1650 = vadd.f32 0.0, %v1649
    %v1651 = vpop.f32.mrb[0].mxu0
    %1652 = vdwg.mxu0
    %1653 = vrot.lane.b32.xlu0 %v154, 40
    %v1654 = vpop.permute.xlu0 %1653
    %v1657 = vsel %vm166, %v1576, 0
    %1659 = vmatprep.subr.mxu0 0.0
    %1660 = vmatpush1.msra.mxu0 %v1654
    %1661 = vmatprep.subr.mxu0 0.0
    %1662 = vmatpush1.msra.mxu0 0.0
    %1663 = vmatprep.subr.mxu0 0.0
    %1664 = vmatpush1.msra.mxu0 0.0
    %1665 = vmatprep.subr.mxu0 0.0
    %1666 = vmatpush1.msra.mxu0 0.0
    %1667 = vmatprep.subr.mxu0 0.0
    %1668 = vmatpush1.msra.mxu0 0.0
    %1669 = vmatprep.subr.mxu0 0.0
    %1670 = vmatpush1.msra.mxu0 0.0
    %1671 = vmatprep.subr.mxu0 0.0
    %1672 = vmatpush1.msra.mxu0 0.0
    %1673 = vmatprep.subr.mxu0 0.0
    %1674 = vmatpush1.msra.mxu0 0.0
    %1675 = vmatprep.subr.mxu0 0.0
    %1676 = vmatpush1.msra.mxu0 0.0
    %1677 = vmatprep.subr.mxu0 0.0
    %1678 = vmatpush1.msra.mxu0 0.0
    %1679 = vmatprep.subr.mxu0 0.0
    %1680 = vmatpush1.msra.mxu0 0.0
    %1681 = vmatprep.subr.mxu0 0.0
    %1682 = vmatpush1.msra.mxu0 0.0
    %1683 = vmatprep.subr.mxu0 0.0
    %1684 = vmatpush1.msra.mxu0 0.0
    %1685 = vmatprep.subr.mxu0 0.0
    %1686 = vmatpush1.msra.mxu0 0.0
    %1687 = vmatprep.subr.mxu0 0.0
    %1688 = vmatpush1.msra.mxu0 0.0
    %1689 = vmatprep.subr.mxu0 0.0
    %1690 = vmatpush1.msra.mxu0 0.0
    %1691 = vmatprep.subr.mxu0 0.0
    %1692 = vmatpush1.msra.mxu0 0.0
    %1693 = vmatprep.subr.mxu0 0.0
    %1694 = vmatpush1.msra.mxu0 0.0
    %1695 = vmatprep.subr.mxu0 0.0
    %1696 = vmatpush1.msra.mxu0 0.0
    %1697 = vmatprep.subr.mxu0 0.0
    %1698 = vmatpush1.msra.mxu0 0.0
    %1699 = vmatprep.subr.mxu0 0.0
    %1700 = vmatpush1.msra.mxu0 0.0
    %1701 = vmatprep.subr.mxu0 0.0
    %1702 = vmatpush1.msra.mxu0 0.0
    %1703 = vmatprep.subr.mxu0 0.0
    %1704 = vmatpush1.msra.mxu0 0.0
    %1705 = vmatprep.subr.mxu0 0.0
    %1706 = vmatpush1.msra.mxu0 0.0
    %1707 = vmatprep.subr.mxu0 0.0
    %1708 = vmatpush1.msra.mxu0 0.0
    %1709 = vmatprep.subr.mxu0 0.0
    %1710 = vmatpush1.msra.mxu0 0.0
    %1711 = vmatprep.subr.mxu0 0.0
    %1712 = vmatpush1.msra.mxu0 0.0
    %1713 = vmatprep.subr.mxu0 0.0
    %1714 = vmatpush1.msra.mxu0 0.0
    %1715 = vmatprep.subr.mxu0 0.0
    %1716 = vmatpush1.msra.mxu0 0.0
    %1717 = vmatprep.subr.mxu0 0.0
    %1718 = vmatpush1.msra.mxu0 0.0
    %1719 = vmatprep.subr.mxu0 0.0
    %1720 = vmatpush1.msra.mxu0 0.0
    %1721 = vmatprep.subr.mxu0 0.0
    %1722 = vmatpush1.msra.mxu0 0.0
    %1723 = vmatprep.mubr.f32.mxu0 0.0
    %1724 = vmatmul.mubr.f32.gmra.mrb[0].mxu0 %v1657
    %v1725 = vpop.f32.mrb[0].mxu0
    %v1726 = vadd.f32 0.0, %v1725
    %v1727 = vpop.f32.mrb[0].mxu0
    %1728 = vdwg.mxu0
    %v1730 = vsel %vm166, %v1650, 0
    %v1733 = vsel %vm166, %v1726, 0
    %1735 = vmatprep.subr.mxu0 0.0
    %1736 = vmatpush1.msra.mxu0 %v162
    %1737 = vmatprep.subr.mxu0 0.0
    %1738 = vmatpush1.msra.mxu0 0.0
    %1739 = vmatprep.subr.mxu0 0.0
    %1740 = vmatpush1.msra.mxu0 0.0
    %1741 = vmatprep.subr.mxu0 0.0
    %1742 = vmatpush1.msra.mxu0 0.0
    %1743 = vmatprep.subr.mxu0 0.0
    %1744 = vmatpush1.msra.mxu0 0.0
    %1745 = vmatprep.subr.mxu0 0.0
    %1746 = vmatpush1.msra.mxu0 0.0
    %1747 = vmatprep.subr.mxu0 0.0
    %1748 = vmatpush1.msra.mxu0 0.0
    %1749 = vmatprep.subr.mxu0 0.0
    %1750 = vmatpush1.msra.mxu0 0.0
    %1751 = vmatprep.subr.mxu0 0.0
    %1752 = vmatpush1.msra.mxu0 0.0
    %1753 = vmatprep.subr.mxu0 0.0
    %1754 = vmatpush1.msra.mxu0 0.0
    %1755 = vmatprep.subr.mxu0 0.0
    %1756 = vmatpush1.msra.mxu0 0.0
    %1757 = vmatprep.subr.mxu0 0.0
    %1758 = vmatpush1.msra.mxu0 0.0
    %1759 = vmatprep.subr.mxu0 0.0
    %1760 = vmatpush1.msra.mxu0 0.0
    %1761 = vmatprep.subr.mxu0 0.0
    %1762 = vmatpush1.msra.mxu0 0.0
    %1763 = vmatprep.subr.mxu0 0.0
    %1764 = vmatpush1.msra.mxu0 0.0
    %1765 = vmatprep.subr.mxu0 0.0
    %1766 = vmatpush1.msra.mxu0 0.0
    %1767 = vmatprep.subr.mxu0 0.0
    %1768 = vmatpush1.msra.mxu0 0.0
    %1769 = vmatprep.subr.mxu0 0.0
    %1770 = vmatpush1.msra.mxu0 0.0
    %1771 = vmatprep.subr.mxu0 0.0
    %1772 = vmatpush1.msra.mxu0 0.0
    %1773 = vmatprep.subr.mxu0 0.0
    %1774 = vmatpush1.msra.mxu0 0.0
    %1775 = vmatprep.subr.mxu0 0.0
    %1776 = vmatpush1.msra.mxu0 0.0
    %1777 = vmatprep.subr.mxu0 0.0
    %1778 = vmatpush1.msra.mxu0 0.0
    %1779 = vmatprep.subr.mxu0 0.0
    %1780 = vmatpush1.msra.mxu0 0.0
    %1781 = vmatprep.subr.mxu0 0.0
    %1782 = vmatpush1.msra.mxu0 0.0
    %1783 = vmatprep.subr.mxu0 0.0
    %1784 = vmatpush1.msra.mxu0 0.0
    %1785 = vmatprep.subr.mxu0 0.0
    %1786 = vmatpush1.msra.mxu0 0.0
    %1787 = vmatprep.subr.mxu0 0.0
    %1788 = vmatpush1.msra.mxu0 0.0
    %1789 = vmatprep.subr.mxu0 0.0
    %1790 = vmatpush1.msra.mxu0 0.0
    %1791 = vmatprep.subr.mxu0 0.0
    %1792 = vmatpush1.msra.mxu0 0.0
    %1793 = vmatprep.subr.mxu0 0.0
    %1794 = vmatpush1.msra.mxu0 0.0
    %1795 = vmatprep.subr.mxu0 0.0
    %1796 = vmatpush1.msra.mxu0 0.0
    %1797 = vmatprep.subr.mxu0 0.0
    %1798 = vmatpush1.msra.mxu0 0.0
    %1799 = vmatprep.mubr.f32.mxu0 0.0
    %1800 = vmatmul.mubr.f32.gmra.mrb[0].mxu0 %v1730
    %v1801 = vpop.f32.mrb[0].mxu0
    %v1802 = vadd.f32 0.0, %v1801
    %v1803 = vpop.f32.mrb[0].mxu0
    %1804 = vmatprep.mubr.f32.mxu0 0.0
    %1805 = vmatmul.mubr.f32.gmra.mrb[0].mxu0 %v1733
    %v1806 = vpop.f32.mrb[0].mxu0
    %v1807 = vadd.f32 0.0, %v1806
    %v1808 = vpop.f32.mrb[0].mxu0
    %1809 = vdwg.mxu0
    %v1810 = vadd.f32 %v1397, %v1802
    %v1811 = vadd.f32 %v1398, %v1807
    %v1812 = vld [vmem:[%s4] sm:$0x1]
    %v1814 = vlaneseq
    %v1815 = vshrl.u32 %v1814, 7
    %v1816 = vsub.s32 0, %v1815
    %v1817 = vrot.slane %v1812, %v1816
    %v1819 = vadd.f32 %v1810, %v1817
    %v1820 = vadd.f32 %v1811, %v1817
    %1821 = vst.msk [vmem:[#allocation8] sm:$0xff] %vm75, %v1819
    %1822 = vst.msk [vmem:[#allocation8 + $0x8] sm:$0xff] %vm75, %v1820
    // Predicated region
    $region34: #{tpu_custom_call.1} parent=1 // pred_check
      _
    $region35: #{tpu_custom_call.1} parent=1 // pred_check_branch
      %1824 = sbr.rel (0) target = $region37
    $region36: #{tpu_custom_call.1} parent=1 // pred_region
      %s1826 = ssub.s32 256, 256
      %1827 = vsyncadd [#allocation4], %s1826
      %s1828 = sshll.u32 [#allocation8], 4
      %s1829 = int_to_ptr.vmem [resolvable:$true] %s1828
      %1834 = dma.vmem_to_hbm [thread:$0]  %s1829, 256, %s5, [#allocation4], 128, 128, 8
    $region37: #{tpu_custom_call.1} parent=1 // pred_fallthru
      _
    // Predicated region
    $region38: #{tpu_custom_call.1} parent=1 // pred_check
      _
    $region39: #{tpu_custom_call.1} parent=1 // pred_check_branch
      %1836 = sbr.rel (0) target = $region41
    $region40: #{tpu_custom_call.1} parent=1 // pred_region
      %1837 = dma.done [#allocation4], 256
    $region41: #{tpu_custom_call.1} parent=1 // pred_fallthru
      _
    %1838 = vsyncpa [#allocation3], 1
    %1839 = vsyncpa [#allocation6], 1
    %1840 = vsyncpa [#allocation4], 1

</llo_original>
